<compile_context>
chip_gen: v6e
topology: v6e:2x2x1
jax: 0.10.0
libtpu: 0.0.40
codegen_flags: <defaults>
</compile_context>

<pallas_src>
import jax
import jax.numpy as jnp
from jax.experimental import pallas as pl
from jax.experimental.pallas import tpu as pltpu

LANE = 128
SUBLANE = 8


def _rup(n, m):
    return ((n + m - 1) // m) * m


def _pad2d(x, rows, cols):
    return jnp.pad(x, ((0, rows - x.shape[0]), (0, cols - x.shape[1])))


# ---------------------------------------------------------------------------
# Fused kernel.  Grid = (row_blocks [parallel], keys [arbitrary/reduction]).
#   h_ref    : [N_pad, FIN_PAD]      node features (lane-padded, invariant)
#   wlin_ref : [FIN_PAD, F_PAD]      main linear weight (invariant)
#   blin_ref : [1, F_PAD]            main linear bias (invariant)
#   wh_ref   : [1, FIN_PAD, F_PAD]   per-key weight, node-feature rows
#   wd_ref   : [1, OH_PAD, F_PAD]    per-key weight, degree rows
#   bk_ref   : [1, 1, F_PAD]         per-key bias
#   pair_ref : [1, P_pad, t] int32   gather indices (pad rows = 0)
#   deg_ref  : [1, P_pad, t] int32   degree IDs     (pad rows = 0)
#   scat_ref : [1, 1, P_pad] int32   scatter indices (pad = -1 -> dropped)
#   eps_ref  : [K, 1] f32 (SMEM)     per-key eps
#   out_ref  : [n_tile, F_PAD]       h3 row tile; VMEM-resident accumulator
# ---------------------------------------------------------------------------
def _make_fused_kernel(t, P_pad, N_pad, n_tile, OH_PAD, F_PAD,
                       combination, use_scalar, num_row_blocks):

    def kernel(h_ref, wlin_ref, blin_ref, wh_ref, wd_ref, bk_ref,
               pair_ref, deg_ref, scat_ref, eps_ref, out_ref):
        key = pl.program_id(1)

        if num_row_blocks == 1:
            row0 = 0
        else:
            row0 = pl.multiple_of(pl.program_id(0) * n_tile, n_tile)

        # --- h3 = h @ W_lin + b_lin for this row tile, once per row tile. ---
        @pl.when(key == 0)
        def _():
            if num_row_blocks == 1:
                h_rows = h_ref[...]
            else:
                h_rows = h_ref[pl.ds(row0, n_tile), :]
            out_ref[...] = (
                jnp.dot(h_rows, wlin_ref[...], preferred_element_type=jnp.float32)
                + blin_ref[...]
            )

        # Transform-then-gather (exact for one-hot rows):
        #   gather(h) @ W_h == onehot @ (h @ W_h)
        hW = jnp.dot(h_ref[...], wh_ref[0],
                     preferred_element_type=jnp.float32)          # [N_pad, F_PAD]
        wd = wd_ref[0]                                            # [OH_PAD, F_PAD]
        bias = bk_ref[0]                                          # [1, F_PAD]
        pair = pair_ref[0]                                        # [P_pad, t] int32
        deg = deg_ref[0]                                          # [P_pad, t] int32

        # Hoisted iotas, reused by every tuple position of this key.
        node_iota = jax.lax.broadcasted_iota(jnp.int32, (P_pad, N_pad), 1)
        deg_iota = jax.lax.broadcasted_iota(jnp.int32, (P_pad, OH_PAD), 1)

        def onehots(i):
            g = (node_iota == pair[:, i:i + 1]).astype(jnp.float32)   # [P_pad, N_pad]
            d = (deg_iota == deg[:, i:i + 1]).astype(jnp.float32)     # [P_pad, OH_PAD]
            return g, d

        if combination == "multi":
            h_temp = None
            for i in range(t):                                    # t is small & static
                g, d = onehots(i)
                z = (jnp.dot(g, hW, preferred_element_type=jnp.float32)
                     + jnp.dot(d, wd, preferred_element_type=jnp.float32)
                     + bias)                                      # [P_pad, F_PAD]
                s = jax.nn.sigmoid(z)
                h_temp = s if h_temp is None else h_temp * s
        else:  # 'sum'
            g_acc, d_acc = onehots(0)
            for i in range(1, t):
                g, d = onehots(i)
                g_acc = g_acc + g
                d_acc = d_acc + d
            z = (jnp.dot(g_acc, hW, preferred_element_type=jnp.float32)
                 + jnp.dot(d_acc, wd, preferred_element_type=jnp.float32)
                 + bias)
            h_temp = jnp.maximum(z, 0.0)

        # Fold (1+eps) into the small [P_pad, F_PAD] operand, not into h_sum.
        if use_scalar:
            h_temp = h_temp * (1.0 + eps_ref[key, 0])

        # scatter_add as a one-hot matmul; padded pairs carry index -1 -> zero col.
        scat_row = scat_ref[0]                                    # [1, P_pad]
        row_iota = jax.lax.broadcasted_iota(jnp.int32, (n_tile, P_pad), 0) + row0
        scat_oh = (row_iota == scat_row).astype(jnp.float32)      # [n_tile, P_pad]

        out_ref[...] += jnp.dot(scat_oh, h_temp, preferred_element_type=jnp.float32)

    return kernel


def _vmem_limit_bytes(N_pad, n_tile, FIN_PAD, F_PAD, OH_PAD, P_pad):
    f32 = 4
    est = 0
    est += N_pad * FIN_PAD * f32                              # h  (Buffered(1))
    est += FIN_PAD * F_PAD * f32                              # W_lin (Buffered(1))
    est += SUBLANE * F_PAD * f32                              # b_lin
    est += 2 * n_tile * F_PAD * f32                           # out tile (x2 buffers)
    est += 2 * (FIN_PAD + OH_PAD + SUBLANE) * F_PAD * f32     # per-key W_h/W_d/b
    est += 2 * 2 * P_pad * LANE * f32                         # pair + degree-id tiles
    est += 2 * SUBLANE * max(P_pad, LANE) * f32               # scatter-index tile
    # live in-kernel intermediates (hW, one-hots, z/s/h_temp, scat_oh)
    est += N_pad * F_PAD * f32
    est += P_pad * (max(N_pad, LANE) + max(OH_PAD, LANE)) * f32
    est += 3 * P_pad * F_PAD * f32
    est += n_tile * max(P_pad, LANE) * f32
    return int(min(100 * 2 ** 20, max(32 * 2 ** 20, 2 * est)))


def gnn_layer_fused(h_pad, wlin_pad, blin_pad, wh_all, wd_all, bk_all,
                    pair_all, deg_all, scat_all, eps_all,
                    combination, use_scalar, f_out, n_rows, num_row_blocks):
    N_pad, FIN_PAD = h_pad.shape
    K, P_pad, t = pair_all.shape
    OH_PAD = wd_all.shape[1]
    F_PAD = wlin_pad.shape[1]
    n_tile = N_pad // num_row_blocks

    kernel = _make_fused_kernel(t, P_pad, N_pad, n_tile, OH_PAD, F_PAD,
                                combination, use_scalar, num_row_blocks)

    invariant = pl.Buffered(1)   # fetched once, single-buffered (grid-invariant)

    out = pl.pallas_call(
        kernel,
        out_shape=jax.ShapeDtypeStruct((N_pad, F_PAD), jnp.float32),
        grid_spec=pltpu.PrefetchScalarGridSpec(
            num_scalar_prefetch=0,
            grid=(num_row_blocks, K),
            in_specs=[
                pl.BlockSpec((N_pad, FIN_PAD), lambda r, k: (0, 0),
                             pipeline_mode=invariant),                  # h
                pl.BlockSpec((FIN_PAD, F_PAD), lambda r, k: (0, 0),
                             pipeline_mode=invariant),                  # W_lin
                pl.BlockSpec((1, F_PAD), lambda r, k: (0, 0),
                             pipeline_mode=invariant),                  # b_lin
                pl.BlockSpec((1, FIN_PAD, F_PAD), lambda r, k: (k, 0, 0)),  # W_h
                pl.BlockSpec((1, OH_PAD, F_PAD), lambda r, k: (k, 0, 0)),   # W_deg
                pl.BlockSpec((1, 1, F_PAD), lambda r, k: (k, 0, 0)),        # b_key
                pl.BlockSpec((1, P_pad, t), lambda r, k: (k, 0, 0)),        # pair ids
                pl.BlockSpec((1, P_pad, t), lambda r, k: (k, 0, 0)),        # degree ids
                pl.BlockSpec((1, 1, P_pad), lambda r, k: (k, 0, 0)),        # scatter ids
                pl.BlockSpec(memory_space=pltpu.MemorySpace.SMEM),          # eps [K,1]
            ],
            out_specs=pl.BlockSpec((n_tile, F_PAD), lambda r, k: (r, 0)),
        ),
        compiler_params=pltpu.CompilerParams(
            dimension_semantics=("parallel", "arbitrary"),
            vmem_limit_bytes=_vmem_limit_bytes(N_pad, n_tile, FIN_PAD,
                                               F_PAD, OH_PAD, P_pad),
        ),
    )(h_pad, wlin_pad, blin_pad, wh_all, wd_all, bk_all,
      pair_all, deg_all, scat_all, eps_all)
    # Padded output columns/rows carry garbage by design; slice them away.
    return out[:n_rows, :f_out]


# ---------------------------------------------------------------------------
# GNNLayer wrapper: parameter setup + host-side padding / stacking of the
# (static) graph index structures; one fused pallas_call per forward.
# ---------------------------------------------------------------------------
class GNNLayerPallas:
    def __init__(self, in_features, out_features, params, rng_key):
        self.in_features = in_features
        self.out_features = out_features
        self.keys = params["keys"]
        self.d = params["d"]
        self.t = params["t"]
        self.scalar = params["scalar"]
        self.combination = params["combination"]
        self.one_hot_length = params["one_hot_length"]

        self.FIN_PAD = _rup(max(self.in_features, 1), LANE)
        self.OH_PAD = _rup(max(self.one_hot_length, 1), SUBLANE)
        self.F_PAD = _rup(max(self.out_features, 1), LANE)

        C = self.in_features + self.one_hot_length
        k_iter = iter(jax.random.split(rng_key, 2 * len(self.keys) + 2))

        self.w_t, self.b_t, self.eps = {}, {}, {}
        self.wh_pad, self.wd_pad, self.bk_pad = {}, {}, {}
        for key in self.keys:
            k = str(key)
            w = jax.random.normal(next(k_iter), (C, self.out_features), jnp.float32) * 0.1
            b = jax.random.normal(next(k_iter), (self.out_features,), jnp.float32) * 0.1
            self.w_t[k] = w
            self.b_t[k] = b
            # Split key weight into node-feature / degree-row parts; zero-padding
            # contributes exactly zero to the valid output columns.
            self.wh_pad[k] = _pad2d(w[: self.in_features], self.FIN_PAD, self.F_PAD)
            self.wd_pad[k] = _pad2d(w[self.in_features:], self.OH_PAD, self.F_PAD)
            self.bk_pad[k] = _pad2d(b.reshape(1, -1), 1, self.F_PAD)
            if self.scalar:
                self.eps[k] = jnp.zeros((1,), jnp.float32)  # torch.Tensor([0])

        w_lin = jax.random.normal(next(k_iter), (self.in_features, self.out_features),
                                  jnp.float32) * 0.1
        b_lin = jax.random.normal(next(k_iter), (self.out_features,), jnp.float32) * 0.1
        self.w_lin, self.b_lin = w_lin, b_lin
        self.w_lin_pad = _pad2d(w_lin, self.FIN_PAD, self.F_PAD)
        self.b_lin_pad = _pad2d(b_lin.reshape(1, -1), 1, self.F_PAD)

    def __call__(self, h, pair_info, num_row_blocks=1):
        pairs, degrees, scatter = pair_info
        N = h.shape[0]
        N_pad = _rup(max(N, SUBLANE), SUBLANE)

        # Row-split (for v7x's two TensorCores) requires sublane-aligned tiles.
        R = int(num_row_blocks)
        if R < 1 or N_pad % R != 0 or (N_pad // R) % SUBLANE != 0:
            R = 1

        h_pad = _pad2d(h.astype(jnp.float32), N_pad, self.FIN_PAD)

        active = [key for key in pairs if len(scatter[key]) != 0]
        if active:
            P_pad = _rup(max(int(len(scatter[key])) for key in active), SUBLANE)
        else:
            P_pad = SUBLANE

        wh_l, wd_l, bk_l, pair_l, deg_l, scat_l, eps_l = [], [], [], [], [], [], []
        if active:
            for key in active:
                k = str(key)
                wh_l.append(self.wh_pad[k])
                wd_l.append(self.wd_pad[k])
                bk_l.append(self.bk_pad[k])
                eps_l.append(self.eps[k][0] if self.scalar else jnp.float32(0.0))
                P = int(len(scatter[key]))
                p_cols, d_cols = [], []
                for i in range(self.t):
                    p = jnp.asarray(pairs[key][i], jnp.int32)
                    p_cols.append(jnp.pad(p, (0, P_pad - P)))       # pad gathers node 0
                    d = jnp.asarray(degrees[key][i], jnp.float32)
                    # TODO(synk): degree features are assumed one-hot (G3N's
                    # subgraph encoding); only the ID is shipped to the kernel.
                    d_cols.append(jnp.pad(jnp.argmax(d, axis=1).astype(jnp.int32),
                                          (0, P_pad - P)))
                pair_l.append(jnp.stack(p_cols, axis=1))             # [P_pad, t]
                deg_l.append(jnp.stack(d_cols, axis=1))              # [P_pad, t]
                s = jnp.asarray(scatter[key], jnp.int32)
                # Padding MUST stay -1: it is what drops padded pair rows.
                scat_l.append(jnp.pad(s, (0, P_pad - P),
                                      constant_values=-1).reshape(1, P_pad))
        else:
            # No active key: one dummy key whose scatter is all -1 -> zero
            # contribution; only the plain linear remains.
            wh_l.append(jnp.zeros((self.FIN_PAD, self.F_PAD), jnp.float32))
            wd_l.append(jnp.zeros((self.OH_PAD, self.F_PAD), jnp.float32))
            bk_l.append(jnp.zeros((1, self.F_PAD), jnp.float32))
            eps_l.append(jnp.float32(0.0))
            pair_l.append(jnp.zeros((P_pad, self.t), jnp.int32))
            deg_l.append(jnp.zeros((P_pad, self.t), jnp.int32))
            scat_l.append(jnp.full((1, P_pad), -1, jnp.int32))

        wh_all = jnp.stack(wh_l)
        wd_all = jnp.stack(wd_l)
        bk_all = jnp.stack(bk_l)
        pair_all = jnp.stack(pair_l)
        deg_all = jnp.stack(deg_l)
        scat_all = jnp.stack(scat_l)
        eps_all = jnp.stack(eps_l).reshape(-1, 1).astype(jnp.float32)

        return gnn_layer_fused(
            h_pad, self.w_lin_pad, self.b_lin_pad,
            wh_all, wd_all, bk_all, pair_all, deg_all, scat_all, eps_all,
            self.combination, self.scalar, self.out_features, N, R,
        )

    # Pure-JAX reference (same math as the PyTorch module) for verification.
    def reference(self, h, pair_info):
        pairs, degrees, scatter = pair_info
        h3 = h @ self.w_lin + self.b_lin
        for key in pairs:
            if len(scatter[key]) == 0:
                continue
            k = str(key)
            if self.combination == "multi":
                h_temp = 1.0
                for i in range(self.t):
                    h_t = jnp.concatenate([h[pairs[key][i]], degrees[key][i]], axis=1)
                    h_temp = h_temp * jax.nn.sigmoid(h_t @ self.w_t[k] + self.b_t[k])
            else:
                h_temp = 0.0
                for i in range(self.t):
                    h_t = jnp.concatenate([h[pairs[key][i]], degrees[key][i]], axis=1)
                    h_temp = h_temp + h_t
                h_temp = jax.nn.relu(h_temp @ self.w_t[k] + self.b_t[k])
            h_sum = jax.ops.segment_sum(h_temp, scatter[key], num_segments=h.shape[0])
            if self.scalar:
                h_sum = (1.0 + self.eps[k][0]) * h_sum
            h3 = h3 + h_sum
        return h3


if __name__ == "__main__":
    root = jax.random.PRNGKey(0)
    k_h, k_pairs, k_deg, k_scat, k_params = jax.random.split(root, 5)

    # Small, deterministic synthetic graph data.
    N = 16
    F_IN = 32
    F_OUT = 32
    T = 2
    OH = 8          # synthetic subgraph.one_hot_length(t)
    keys_list = [0, 1]
    P_per_key = {0: 24, 1: 16}

    h = jax.random.normal(k_h, (N, F_IN), jnp.float32)

    pairs, degrees, scatter = {}, {}, {}
    kp = jax.random.split(k_pairs, len(keys_list) * T)
    kd = jax.random.split(k_deg, len(keys_list) * T)
    ks = jax.random.split(k_scat, len(keys_list))
    idx = 0
    for ki, key in enumerate(keys_list):
        P = P_per_key[key]
        pairs[key] = []
        degrees[key] = []
        for i in range(T):
            pairs[key].append(jax.random.randint(kp[idx], (P,), 0, N))
            deg_ids = jax.random.randint(kd[idx], (P,), 0, OH)
            degrees[key].append(jax.nn.one_hot(deg_ids, OH, dtype=jnp.float32))
            idx += 1
        scatter[key] = jax.random.randint(ks[ki], (P,), 0, N)

    pair_info = (pairs, degrees, scatter)

    for combo in ("multi", "sum"):
        params = {
            "keys": keys_list, "d": 2, "t": T, "scalar": True,
            "combination": combo, "one_hot_length": OH,
        }
        layer = GNNLayerPallas(F_IN, F_OUT, params, k_params)
        ref = layer.reference(h, pair_info)
        for rb in (1, 2):   # rb=2 exercises the v7x dual-TensorCore row split
            out = jax.block_until_ready(layer(h, pair_info, num_row_blocks=rb))
            assert out.shape == (N, F_OUT)
            assert jnp.allclose(out, ref, atol=1e-4, rtol=1e-4), \
                f"mismatch vs reference ({combo}, row_blocks={rb})"

    print("KERNEL_OK")
</pallas_src>

<mosaic_0001>
module attributes {stable_mosaic.version = 11 : i64} {
  func.func @kernel(%arg0: i32, %arg1: i32, %arg2: memref<16x128xf32, #tpu.memory_space<vmem>>, %arg3: memref<128x128xf32, #tpu.memory_space<vmem>>, %arg4: memref<1x128xf32, #tpu.memory_space<vmem>>, %arg5: memref<1x128x128xf32, #tpu.memory_space<vmem>>, %arg6: memref<1x8x128xf32, #tpu.memory_space<vmem>>, %arg7: memref<1x1x128xf32, #tpu.memory_space<vmem>>, %arg8: memref<1x24x2xi32, #tpu.memory_space<vmem>>, %arg9: memref<1x24x2xi32, #tpu.memory_space<vmem>>, %arg10: memref<1x1x24xi32, #tpu.memory_space<vmem>>, %arg11: memref<2x1xf32, #tpu.memory_space<smem>>, %arg12: memref<16x128xf32, #tpu.memory_space<vmem>>) attributes {dimension_semantics = [#tpu.dimension_semantics<parallel>, #tpu.dimension_semantics<arbitrary>], iteration_bounds = array<i64: 1, 2>, scalar_prefetch = 0 : i64, scratch_operands = 0 : i64, tpu.core_type = #tpu.core_type<tc>, window_params = [{pipeline_mode = #tpu.pipeline_mode<synchronous>, transform_indices = @transform_0, window_bounds = array<i64: 16, 128>}, {pipeline_mode = #tpu.pipeline_mode<synchronous>, transform_indices = @transform_1, window_bounds = array<i64: 128, 128>}, {pipeline_mode = #tpu.pipeline_mode<synchronous>, transform_indices = @transform_2, window_bounds = array<i64: 1, 128>}, {transform_indices = @transform_3, window_bounds = array<i64: 1, 128, 128>}, {transform_indices = @transform_4, window_bounds = array<i64: 1, 8, 128>}, {transform_indices = @transform_5, window_bounds = array<i64: 1, 1, 128>}, {transform_indices = @transform_6, window_bounds = array<i64: 1, 24, 2>}, {transform_indices = @transform_7, window_bounds = array<i64: 1, 24, 2>}, {transform_indices = @transform_8, window_bounds = array<i64: 1, 1, 24>}, {transform_indices = @transform_9, window_bounds = array<i64: 2, 1>}, {transform_indices = @transform_10, window_bounds = array<i64: 16, 128>}]} {
    %c0_i32 = arith.constant 0 : i32
    %0 = arith.cmpi eq, %arg1, %c0_i32 : i32
    %1 = arith.extui %0 : i1 to i32
    %c0_i32_0 = arith.constant 0 : i32
    %2 = arith.cmpi ne, %1, %c0_i32_0 : i32
    scf.if %2 {
      %c0_34 = arith.constant 0 : index
      %c0_35 = arith.constant 0 : index
      %76 = vector.load %arg2[%c0_34, %c0_35] : memref<16x128xf32, #tpu.memory_space<vmem>>, vector<16x128xf32>
      %c0_36 = arith.constant 0 : index
      %c0_37 = arith.constant 0 : index
      %77 = vector.load %arg3[%c0_36, %c0_37] : memref<128x128xf32, #tpu.memory_space<vmem>>, vector<128x128xf32>
      %cst_38 = arith.constant dense<0.000000e+00> : vector<16x128xf32>
      %78 = tpu.matmul %76, %77, %cst_38 {dimension_numbers = #tpu.dot_dimension_numbers<[1], [0], [0], [1], [0, 0, 1, 1], [], []>} : vector<16x128xf32>, vector<128x128xf32>, vector<16x128xf32> -> vector<16x128xf32>
      %c0_39 = arith.constant 0 : index
      %c0_40 = arith.constant 0 : index
      %79 = vector.load %arg4[%c0_39, %c0_40] : memref<1x128xf32, #tpu.memory_space<vmem>>, vector<1x128xf32>
      %80 = vector.broadcast %79 : vector<1x128xf32> to vector<16x128xf32>
      %81 = arith.addf %78, %80 : vector<16x128xf32>
      %c0_41 = arith.constant 0 : index
      %c0_42 = arith.constant 0 : index
      %82 = vector.load %arg12[%c0_41, %c0_42] : memref<16x128xf32, #tpu.memory_space<vmem>>, vector<16x128xf32>
      tpu.vector_store %arg12[%c0_41, %c0_42], %81 {strides = array<i32>} : memref<16x128xf32, #tpu.memory_space<vmem>>, vector<16x128xf32>,
    } else {
    }
    %c0 = arith.constant 0 : index
    %c0_1 = arith.constant 0 : index
    %3 = vector.load %arg2[%c0, %c0_1] : memref<16x128xf32, #tpu.memory_space<vmem>>, vector<16x128xf32>
    %c0_2 = arith.constant 0 : index
    %c0_3 = arith.constant 0 : index
    %c0_4 = arith.constant 0 : index
    %4 = vector.load %arg5[%c0_2, %c0_3, %c0_4] : memref<1x128x128xf32, #tpu.memory_space<vmem>>, vector<1x128x128xf32>
    %5 = vector.shape_cast %4 : vector<1x128x128xf32> to vector<128x128xf32>
    %cst = arith.constant dense<0.000000e+00> : vector<16x128xf32>
    %6 = tpu.matmul %3, %5, %cst {dimension_numbers = #tpu.dot_dimension_numbers<[1], [0], [0], [1], [0, 0, 1, 1], [], []>} : vector<16x128xf32>, vector<128x128xf32>, vector<16x128xf32> -> vector<16x128xf32>
    %c0_5 = arith.constant 0 : index
    %c0_6 = arith.constant 0 : index
    %c0_7 = arith.constant 0 : index
    %7 = vector.load %arg6[%c0_5, %c0_6, %c0_7] : memref<1x8x128xf32, #tpu.memory_space<vmem>>, vector<1x8x128xf32>
    %8 = vector.shape_cast %7 : vector<1x8x128xf32> to vector<8x128xf32>
    %c0_8 = arith.constant 0 : index
    %c0_9 = arith.constant 0 : index
    %c0_10 = arith.constant 0 : index
    %9 = vector.load %arg7[%c0_8, %c0_9, %c0_10] : memref<1x1x128xf32, #tpu.memory_space<vmem>>, vector<1x1x128xf32>
    %10 = vector.shape_cast %9 : vector<1x1x128xf32> to vector<1x128xf32>
    %c0_11 = arith.constant 0 : index
    %c0_12 = arith.constant 0 : index
    %c0_13 = arith.constant 0 : index
    %11 = vector.load %arg8[%c0_11, %c0_12, %c0_13] : memref<1x24x2xi32, #tpu.memory_space<vmem>>, vector<1x24x2xi32>
    %12 = vector.shape_cast %11 : vector<1x24x2xi32> to vector<24x2xi32>
    %c0_14 = arith.constant 0 : index
    %c0_15 = arith.constant 0 : index
    %c0_16 = arith.constant 0 : index
    %13 = vector.load %arg9[%c0_14, %c0_15, %c0_16] : memref<1x24x2xi32, #tpu.memory_space<vmem>>, vector<1x24x2xi32>
    %14 = vector.shape_cast %13 : vector<1x24x2xi32> to vector<24x2xi32>
    %15 = tpu.iota {dimensions = array<i32: 1>} : vector<24x16xi32>
    %16 = tpu.iota {dimensions = array<i32: 1>} : vector<24x8xi32>
    %17 = vector.extract_strided_slice %12 {offsets = [0, 0], sizes = [24, 1], strides = [1, 1]} : vector<24x2xi32> to vector<24x1xi32>
    %18 = vector.broadcast %17 : vector<24x1xi32> to vector<24x16xi32>
    %19 = arith.cmpi eq, %15, %18 : vector<24x16xi32>
    %20 = arith.extui %19 : vector<24x16xi1> to vector<24x16xi32>
    %21 = arith.sitofp %20 : vector<24x16xi32> to vector<24x16xf32>
    %22 = vector.extract_strided_slice %14 {offsets = [0, 0], sizes = [24, 1], strides = [1, 1]} : vector<24x2xi32> to vector<24x1xi32>
    %23 = vector.broadcast %22 : vector<24x1xi32> to vector<24x8xi32>
    %24 = arith.cmpi eq, %16, %23 : vector<24x8xi32>
    %25 = arith.extui %24 : vector<24x8xi1> to vector<24x8xi32>
    %26 = arith.sitofp %25 : vector<24x8xi32> to vector<24x8xf32>
    %cst_17 = arith.constant dense<0.000000e+00> : vector<24x128xf32>
    %27 = tpu.matmul %21, %6, %cst_17 {dimension_numbers = #tpu.dot_dimension_numbers<[1], [0], [0], [1], [0, 0, 1, 1], [], []>} : vector<24x16xf32>, vector<16x128xf32>, vector<24x128xf32> -> vector<24x128xf32>
    %cst_18 = arith.constant dense<0.000000e+00> : vector<24x128xf32>
    %28 = tpu.matmul %26, %8, %cst_18 {dimension_numbers = #tpu.dot_dimension_numbers<[1], [0], [0], [1], [0, 0, 1, 1], [], []>} : vector<24x8xf32>, vector<8x128xf32>, vector<24x128xf32> -> vector<24x128xf32>
    %29 = arith.addf %27, %28 : vector<24x128xf32>
    %30 = vector.broadcast %10 : vector<1x128xf32> to vector<24x128xf32>
    %31 = arith.addf %29, %30 : vector<24x128xf32>
    %32 = arith.negf %31 : vector<24x128xf32>
    %33 = math.exp %32 : vector<24x128xf32>
    %cst_19 = arith.constant 1.000000e+00 : f32
    %34 = vector.broadcast %cst_19 : f32 to vector<24x128xf32>
    %35 = arith.addf %34, %33 : vector<24x128xf32>
    %36 = arith.divf %34, %35 : vector<24x128xf32>
    %37 = vector.extract_strided_slice %12 {offsets = [0, 1], sizes = [24, 1], strides = [1, 1]} : vector<24x2xi32> to vector<24x1xi32>
    %38 = vector.broadcast %37 : vector<24x1xi32> to vector<24x16xi32>
    %39 = arith.cmpi eq, %15, %38 : vector<24x16xi32>
    %40 = arith.extui %39 : vector<24x16xi1> to vector<24x16xi32>
    %41 = arith.sitofp %40 : vector<24x16xi32> to vector<24x16xf32>
    %42 = vector.extract_strided_slice %14 {offsets = [0, 1], sizes = [24, 1], strides = [1, 1]} : vector<24x2xi32> to vector<24x1xi32>
    %43 = vector.broadcast %42 : vector<24x1xi32> to vector<24x8xi32>
    %44 = arith.cmpi eq, %16, %43 : vector<24x8xi32>
    %45 = arith.extui %44 : vector<24x8xi1> to vector<24x8xi32>
    %46 = arith.sitofp %45 : vector<24x8xi32> to vector<24x8xf32>
    %cst_20 = arith.constant dense<0.000000e+00> : vector<24x128xf32>
    %47 = tpu.matmul %41, %6, %cst_20 {dimension_numbers = #tpu.dot_dimension_numbers<[1], [0], [0], [1], [0, 0, 1, 1], [], []>} : vector<24x16xf32>, vector<16x128xf32>, vector<24x128xf32> -> vector<24x128xf32>
    %cst_21 = arith.constant dense<0.000000e+00> : vector<24x128xf32>
    %48 = tpu.matmul %46, %8, %cst_21 {dimension_numbers = #tpu.dot_dimension_numbers<[1], [0], [0], [1], [0, 0, 1, 1], [], []>} : vector<24x8xf32>, vector<8x128xf32>, vector<24x128xf32> -> vector<24x128xf32>
    %49 = arith.addf %47, %48 : vector<24x128xf32>
    %50 = vector.broadcast %10 : vector<1x128xf32> to vector<24x128xf32>
    %51 = arith.addf %49, %50 : vector<24x128xf32>
    %52 = arith.negf %51 : vector<24x128xf32>
    %53 = math.exp %52 : vector<24x128xf32>
    %cst_22 = arith.constant 1.000000e+00 : f32
    %54 = vector.broadcast %cst_22 : f32 to vector<24x128xf32>
    %55 = arith.addf %54, %53 : vector<24x128xf32>
    %56 = arith.divf %54, %55 : vector<24x128xf32>
    %57 = arith.mulf %36, %56 : vector<24x128xf32>
    %58 = arith.index_cast %arg1 : i32 to index
    %c0_23 = arith.constant 0 : index
    %59 = memref.load %arg11[%58, %c0_23] : memref<2x1xf32, #tpu.memory_space<smem>>
    %cst_24 = arith.constant 1.000000e+00 : f32
    %60 = arith.addf %cst_24, %59 : f32
    %61 = vector.broadcast %60 : f32 to vector<24x128xf32>
    %62 = arith.mulf %57, %61 : vector<24x128xf32>
    %c0_25 = arith.constant 0 : index
    %c0_26 = arith.constant 0 : index
    %c0_27 = arith.constant 0 : index
    %63 = vector.load %arg10[%c0_25, %c0_26, %c0_27] : memref<1x1x24xi32, #tpu.memory_space<vmem>>, vector<1x1x24xi32>
    %64 = vector.shape_cast %63 : vector<1x1x24xi32> to vector<1x24xi32>
    %65 = tpu.iota {dimensions = array<i32: 0>} : vector<16x24xi32>
    %c0_i32_28 = arith.constant 0 : i32
    %66 = vector.broadcast %c0_i32_28 : i32 to vector<16x24xi32>
    %67 = arith.addi %65, %66 : vector<16x24xi32>
    %68 = vector.broadcast %64 : vector<1x24xi32> to vector<16x24xi32>
    %69 = arith.cmpi eq, %67, %68 : vector<16x24xi32>
    %70 = arith.extui %69 : vector<16x24xi1> to vector<16x24xi32>
    %71 = arith.sitofp %70 : vector<16x24xi32> to vector<16x24xf32>
    %c0_29 = arith.constant 0 : index
    %c0_30 = arith.constant 0 : index
    %72 = vector.load %arg12[%c0_29, %c0_30] : memref<16x128xf32, #tpu.memory_space<vmem>>, vector<16x128xf32>
    %cst_31 = arith.constant dense<0.000000e+00> : vector<16x128xf32>
    %73 = tpu.matmul %71, %62, %cst_31 {dimension_numbers = #tpu.dot_dimension_numbers<[1], [0], [0], [1], [0, 0, 1, 1], [], []>} : vector<16x24xf32>, vector<24x128xf32>, vector<16x128xf32> -> vector<16x128xf32>
    %74 = arith.addf %72, %73 : vector<16x128xf32>
    %c0_32 = arith.constant 0 : index
    %c0_33 = arith.constant 0 : index
    %75 = vector.load %arg12[%c0_32, %c0_33] : memref<16x128xf32, #tpu.memory_space<vmem>>, vector<16x128xf32>
    tpu.vector_store %arg12[%c0_32, %c0_33], %74 {strides = array<i32>} : memref<16x128xf32, #tpu.memory_space<vmem>>, vector<16x128xf32>,
    return
  }
  func.func @transform_0(%arg0: i32, %arg1: i32) -> (i32, i32) {
    %c0_i32 = arith.constant 0 : i32
    %c0_i32_0 = arith.constant 0 : i32
    %c0_i32_1 = arith.constant 0 : i32
    return %c0_i32, %c0_i32_0 : i32, i32
  }
  func.func @transform_1(%arg0: i32, %arg1: i32) -> (i32, i32) {
    %c0_i32 = arith.constant 0 : i32
    %c0_i32_0 = arith.constant 0 : i32
    %c0_i32_1 = arith.constant 0 : i32
    return %c0_i32, %c0_i32_0 : i32, i32
  }
  func.func @transform_2(%arg0: i32, %arg1: i32) -> (i32, i32) {
    %c0_i32 = arith.constant 0 : i32
    %c0_i32_0 = arith.constant 0 : i32
    %c0_i32_1 = arith.constant 0 : i32
    return %c0_i32, %c0_i32_0 : i32, i32
  }
  func.func @transform_3(%arg0: i32, %arg1: i32) -> (i32, i32, i32) {
    %c0_i32 = arith.constant 0 : i32
    %c0_i32_0 = arith.constant 0 : i32
    %c0_i32_1 = arith.constant 0 : i32
    return %arg1, %c0_i32, %c0_i32_0 : i32, i32, i32
  }
  func.func @transform_4(%arg0: i32, %arg1: i32) -> (i32, i32, i32) {
    %c0_i32 = arith.constant 0 : i32
    %c0_i32_0 = arith.constant 0 : i32
    %c0_i32_1 = arith.constant 0 : i32
    return %arg1, %c0_i32, %c0_i32_0 : i32, i32, i32
  }
  func.func @transform_5(%arg0: i32, %arg1: i32) -> (i32, i32, i32) {
    %c0_i32 = arith.constant 0 : i32
    %c0_i32_0 = arith.constant 0 : i32
    %c0_i32_1 = arith.constant 0 : i32
    return %arg1, %c0_i32, %c0_i32_0 : i32, i32, i32
  }
  func.func @transform_6(%arg0: i32, %arg1: i32) -> (i32, i32, i32) {
    %c0_i32 = arith.constant 0 : i32
    %c0_i32_0 = arith.constant 0 : i32
    %c0_i32_1 = arith.constant 0 : i32
    return %arg1, %c0_i32, %c0_i32_0 : i32, i32, i32
  }
  func.func @transform_7(%arg0: i32, %arg1: i32) -> (i32, i32, i32) {
    %c0_i32 = arith.constant 0 : i32
    %c0_i32_0 = arith.constant 0 : i32
    %c0_i32_1 = arith.constant 0 : i32
    return %arg1, %c0_i32, %c0_i32_0 : i32, i32, i32
  }
  func.func @transform_8(%arg0: i32, %arg1: i32) -> (i32, i32, i32) {
    %c0_i32 = arith.constant 0 : i32
    %c0_i32_0 = arith.constant 0 : i32
    %c0_i32_1 = arith.constant 0 : i32
    return %arg1, %c0_i32, %c0_i32_0 : i32, i32, i32
  }
  func.func @transform_9(%arg0: i32, %arg1: i32) -> (i32, i32) {
    %c0_i32 = arith.constant 0 : i32
    %c0_i32_0 = arith.constant 0 : i32
    %c0_i32_1 = arith.constant 0 : i32
    return %c0_i32, %c0_i32_0 : i32, i32
  }
  func.func @transform_10(%arg0: i32, %arg1: i32) -> (i32, i32) {
    %c0_i32 = arith.constant 0 : i32
    %c0_i32_0 = arith.constant 0 : i32
    return %arg0, %c0_i32 : i32, i32
  }
}

</mosaic_0001>

<llo_original>
// kernel: tpu_custom_call.1
$region0: #{tpu_custom_call.1}
  #allocation0 [shape = 'u32[]', space=smem, size = 0x4, offset = 0x4, fixed_abs, tag = 'smem constant byte address 0x4 - core index']
  #allocation1 [shape = 'u32[144,128]{1,0:T(1,128)}', space=vmem, size = 0x12000, scoped, tag = 'internal scratch']
  %s0 = inlined_call_operand.vmem [shape: f32[16,128], index: 0, kind: input, shape index: {}]
  %s1 = inlined_call_operand.hbm [shape: f32[128,128], index: 1, kind: input, shape index: {}]
  %s2 = inlined_call_operand.vmem [shape: f32[1,128], index: 2, kind: input, shape index: {}]
  %s3 = inlined_call_operand.hbm [shape: f32[2,128,128], index: 3, kind: input, shape index: {}]
  %s4 = inlined_call_operand.vmem [shape: f32[2,8,128], index: 4, kind: input, shape index: {}]
  %s5 = inlined_call_operand.vmem [shape: f32[2,1,128], index: 5, kind: input, shape index: {}]
  %s6 = inlined_call_operand.vmem [shape: s32[2,24,2], index: 6, kind: input, shape index: {}]
  %s7 = inlined_call_operand.vmem [shape: s32[2,24,2], index: 7, kind: input, shape index: {}]
  %s8 = inlined_call_operand.vmem [shape: s32[2,1,24], index: 8, kind: input, shape index: {}]
  %s9 = inlined_call_operand.vmem [shape: f32[2,1], index: 9, kind: input, shape index: {}]
  %s10 = inlined_call_operand.hbm [shape: f32[16,128], index: 10, kind: output, shape index: {}]
  %s11 = sld [smem:[#allocation0]]
  $region89: #{tpu_custom_call.1} parent=0
    _
  %s13 = ssub.s32 1, %s11
  %s14 = scalar_select 0, %s13, %s11
  $region1: #{tpu_custom_call.1} parent=0
    #allocation2 [shape = 'u8[65536]{0}', space=vmem, size = 0x10000, scoped, tag = 'input window, operand 1, single buffered']
    #allocation3 [shape = 's32[2]{0}', space=sflag, size = 0x8, scoped, tag = 'scoped memory for tpu_custom_call.1']
    #allocation4 [shape = 's32[2]{0}', space=sflag, size = 0x8, scoped, tag = 'scoped memory for tpu_custom_call.1']
    #allocation5 [shape = 's32[2]{0}', space=sflag, size = 0x8, scoped, tag = 'scoped memory for tpu_custom_call.1']
    #allocation6 [shape = 'u8[131072]{0}', space=vmem, size = 0x20000, scoped, tag = 'input window, operand 3']
    #allocation7 [shape = 's32[2]{0}', space=sflag, size = 0x8, scoped, tag = 'scoped memory for tpu_custom_call.1']
    #allocation8 [shape = 'u8[1024]{0}', space=smem, size = 0x400, scoped, tag = 'input window, operand 9, single buffered']
    #allocation9 [shape = 'u8[8192]{0}', space=vmem, size = 0x2000, scoped, tag = 'output window, operand 0, single buffered']
    %15 = vsyncpa [#allocation3], 0
    %16 = vsyncpa [#allocation7], 0
    %s17 = scalar_lea.sflag [#allocation7], 1
    %18 = vsyncpa %s17, 0
    %19 = vsyncpa [#allocation5], 0
    %20 = vsyncpa [#allocation4], 0
    loop: start=0, step=1, limit=4
    $region2: #{tpu_custom_call.1} parent=1 // loop_pre_header
      _
    $region3: #{tpu_custom_call.1} parent=1 // loop_header
      %s22 = sphi 0, %s26
      %p23 = scmp.ge.s32.totalorder %s22, 4
      %s29 = sphi 0, %s41
      %s30 = sphi 0, %s37
      %s31 = sphi 0, %s29
      %s32 = sphi 0, %s30
      %s33 = sphi 0, %s31
      %s34 = sphi 0, %s32
      %s42 = sphi 0, %s42
      %s44 = sphi 0, %s42
      %s45 = sphi 0, %s44
      %s59 = sphi 0, %s45
      %s63 = sphi 0, %s63
      %s65 = sphi 0, %s63
      %s66 = sphi 0, %s65
      %s80 = sphi 0, %s66
      %s84 = sphi 0, %s84
      %s86 = sphi 0, %s84
      %s87 = sphi 0, %s86
      %s101 = sphi 0, %s87
      %s107 = sphi 0, %s109
      %s110 = sphi 0, %s107
      %s111 = sphi 0, %s110
      %s127 = sphi 0, %s111
      %s133 = sphi 0, %s135
      %s136 = sphi 0, %s133
      %s137 = sphi 0, %s136
      %s153 = sphi 0, %s137
      %s159 = sphi 0, %s161
      %s162 = sphi 0, %s159
      %s163 = sphi 0, %s162
      %s179 = sphi 0, %s163
      %s185 = sphi 0, %s187
      %s188 = sphi 0, %s185
      %s189 = sphi 0, %s188
      %s205 = sphi 0, %s189
      %s211 = sphi 0, %s213
      %s214 = sphi 0, %s211
      %s215 = sphi 0, %s214
      %s231 = sphi 0, %s215
      %s237 = sphi 0, %s239
      %s240 = sphi 0, %s237
      %s241 = sphi 0, %s240
      %s257 = sphi 0, %s241
      %s261 = sphi 0, %s261
      %s263 = sphi 0, %s261
      %s264 = sphi 0, %s263
      %s278 = sphi 0, %s264
      %s284 = sphi 0, %s286
      %s287 = sphi 0, %s284
      %s288 = sphi 0, %s287
      %s304 = sphi 0, %s288
    $region4: #{tpu_custom_call.1} parent=1 // loop_header_branch
      %25 = sbr.rel (%p23) target = $region8
    $region5: #{tpu_custom_call.1} parent=1 // loop_body
      %s27 = ssub.s32 %s22, 1
      %s28 = ssub.s32 %s22, 2
      %s35 = sadd.s32 1, %s30
      %p36 = scmp.ge.s32.totalorder %s35, 2
      %s37 = scalar_select %p36, 0, %s35
      %s38 = sadd.s32 1, %s29
      %s39 = scalar_select %p36, %s38, %s29
      %p40 = scmp.ge.s32.totalorder %s39, 1
      %s41 = scalar_select %p40, 0, %s39
      %s43 = sadd.s32 %s42, 1
      %p46 = scmp.eq.s32.totalorder %s22, 1
      %p47 = scmp.ne.s32.totalorder %s42, %s44
      %p48 = scmp.eq.s32.totalorder %s22, 0
      %p49 = por %p47, %p48
      %p50 = scmp.ne.s32.totalorder %s42, %s44
      %p51 = scmp.eq.s32.totalorder %s27, 1
      %p52 = por %p50, %p51
      %p53 = scmp.ne.s32.totalorder %s44, %s45
      %p54 = scmp.eq.s32.totalorder %s27, 0
      %p55 = por %p53, %p54
      %p56 = scmp.ne.s32.totalorder %s44, %s45
      %p57 = scmp.eq.s32.totalorder %s28, 1
      %p58 = por %p56, %p57
      %p60 = scmp.ne.s32.totalorder %s45, %s59
      %p61 = scmp.eq.s32.totalorder %s28, 0
      %p62 = por %p60, %p61
      %s64 = sadd.s32 %s63, 1
      %p67 = scmp.eq.s32.totalorder %s22, 1
      %p68 = scmp.ne.s32.totalorder %s63, %s65
      %p69 = scmp.eq.s32.totalorder %s22, 0
      %p70 = por %p68, %p69
      %p71 = scmp.ne.s32.totalorder %s63, %s65
      %p72 = scmp.eq.s32.totalorder %s27, 1
      %p73 = por %p71, %p72
      %p74 = scmp.ne.s32.totalorder %s65, %s66
      %p75 = scmp.eq.s32.totalorder %s27, 0
      %p76 = por %p74, %p75
      %p77 = scmp.ne.s32.totalorder %s65, %s66
      %p78 = scmp.eq.s32.totalorder %s28, 1
      %p79 = por %p77, %p78
      %p81 = scmp.ne.s32.totalorder %s66, %s80
      %p82 = scmp.eq.s32.totalorder %s28, 0
      %p83 = por %p81, %p82
      %s85 = sadd.s32 %s84, 1
      %p88 = scmp.eq.s32.totalorder %s22, 1
      %p89 = scmp.ne.s32.totalorder %s84, %s86
      %p90 = scmp.eq.s32.totalorder %s22, 0
      %p91 = por %p89, %p90
      %p92 = scmp.ne.s32.totalorder %s84, %s86
      %p93 = scmp.eq.s32.totalorder %s27, 1
      %p94 = por %p92, %p93
      %p95 = scmp.ne.s32.totalorder %s86, %s87
      %p96 = scmp.eq.s32.totalorder %s27, 0
      %p97 = por %p95, %p96
      %p98 = scmp.ne.s32.totalorder %s86, %s87
      %p99 = scmp.eq.s32.totalorder %s28, 1
      %p100 = por %p98, %p99
      %p102 = scmp.ne.s32.totalorder %s87, %s101
      %p103 = scmp.eq.s32.totalorder %s28, 0
      %p104 = por %p102, %p103
      %s105 = ssub.s32 %s30, %s37
      %p106 = scmp.eq.s32.totalorder %s105, 0
      %s108 = sadd.s32 %s107, 1
      %s109 = scalar_select %p106, %s107, %s108
      %p112 = pneg %p106
      %p113 = scmp.eq.s32.totalorder %s22, 1
      %p114 = por %p112, %p113
      %p115 = scmp.ne.s32.totalorder %s107, %s110
      %p116 = scmp.eq.s32.totalorder %s22, 0
      %p117 = por %p115, %p116
      %p118 = scmp.ne.s32.totalorder %s107, %s110
      %p119 = scmp.eq.s32.totalorder %s27, 1
      %p120 = por %p118, %p119
      %p121 = scmp.ne.s32.totalorder %s110, %s111
      %p122 = scmp.eq.s32.totalorder %s27, 0
      %p123 = por %p121, %p122
      %p124 = scmp.ne.s32.totalorder %s110, %s111
      %p125 = scmp.eq.s32.totalorder %s28, 1
      %p126 = por %p124, %p125
      %p128 = scmp.ne.s32.totalorder %s111, %s127
      %p129 = scmp.eq.s32.totalorder %s28, 0
      %p130 = por %p128, %p129
      %s131 = ssub.s32 %s30, %s37
      %p132 = scmp.eq.s32.totalorder %s131, 0
      %s134 = sadd.s32 %s133, 1
      %s135 = scalar_select %p132, %s133, %s134
      %p138 = pneg %p132
      %p139 = scmp.eq.s32.totalorder %s22, 1
      %p140 = por %p138, %p139
      %p141 = scmp.ne.s32.totalorder %s133, %s136
      %p142 = scmp.eq.s32.totalorder %s22, 0
      %p143 = por %p141, %p142
      %p144 = scmp.ne.s32.totalorder %s133, %s136
      %p145 = scmp.eq.s32.totalorder %s27, 1
      %p146 = por %p144, %p145
      %p147 = scmp.ne.s32.totalorder %s136, %s137
      %p148 = scmp.eq.s32.totalorder %s27, 0
      %p149 = por %p147, %p148
      %p150 = scmp.ne.s32.totalorder %s136, %s137
      %p151 = scmp.eq.s32.totalorder %s28, 1
      %p152 = por %p150, %p151
      %p154 = scmp.ne.s32.totalorder %s137, %s153
      %p155 = scmp.eq.s32.totalorder %s28, 0
      %p156 = por %p154, %p155
      %s157 = ssub.s32 %s30, %s37
      %p158 = scmp.eq.s32.totalorder %s157, 0
      %s160 = sadd.s32 %s159, 1
      %s161 = scalar_select %p158, %s159, %s160
      %p164 = pneg %p158
      %p165 = scmp.eq.s32.totalorder %s22, 1
      %p166 = por %p164, %p165
      %p167 = scmp.ne.s32.totalorder %s159, %s162
      %p168 = scmp.eq.s32.totalorder %s22, 0
      %p169 = por %p167, %p168
      %p170 = scmp.ne.s32.totalorder %s159, %s162
      %p171 = scmp.eq.s32.totalorder %s27, 1
      %p172 = por %p170, %p171
      %p173 = scmp.ne.s32.totalorder %s162, %s163
      %p174 = scmp.eq.s32.totalorder %s27, 0
      %p175 = por %p173, %p174
      %p176 = scmp.ne.s32.totalorder %s162, %s163
      %p177 = scmp.eq.s32.totalorder %s28, 1
      %p178 = por %p176, %p177
      %p180 = scmp.ne.s32.totalorder %s163, %s179
      %p181 = scmp.eq.s32.totalorder %s28, 0
      %p182 = por %p180, %p181
      %s183 = ssub.s32 %s30, %s37
      %p184 = scmp.eq.s32.totalorder %s183, 0
      %s186 = sadd.s32 %s185, 1
      %s187 = scalar_select %p184, %s185, %s186
      %p190 = pneg %p184
      %p191 = scmp.eq.s32.totalorder %s22, 1
      %p192 = por %p190, %p191
      %p193 = scmp.ne.s32.totalorder %s185, %s188
      %p194 = scmp.eq.s32.totalorder %s22, 0
      %p195 = por %p193, %p194
      %p196 = scmp.ne.s32.totalorder %s185, %s188
      %p197 = scmp.eq.s32.totalorder %s27, 1
      %p198 = por %p196, %p197
      %p199 = scmp.ne.s32.totalorder %s188, %s189
      %p200 = scmp.eq.s32.totalorder %s27, 0
      %p201 = por %p199, %p200
      %p202 = scmp.ne.s32.totalorder %s188, %s189
      %p203 = scmp.eq.s32.totalorder %s28, 1
      %p204 = por %p202, %p203
      %p206 = scmp.ne.s32.totalorder %s189, %s205
      %p207 = scmp.eq.s32.totalorder %s28, 0
      %p208 = por %p206, %p207
      %s209 = ssub.s32 %s30, %s37
      %p210 = scmp.eq.s32.totalorder %s209, 0
      %s212 = sadd.s32 %s211, 1
      %s213 = scalar_select %p210, %s211, %s212
      %p216 = pneg %p210
      %p217 = scmp.eq.s32.totalorder %s22, 1
      %p218 = por %p216, %p217
      %p219 = scmp.ne.s32.totalorder %s211, %s214
      %p220 = scmp.eq.s32.totalorder %s22, 0
      %p221 = por %p219, %p220
      %p222 = scmp.ne.s32.totalorder %s211, %s214
      %p223 = scmp.eq.s32.totalorder %s27, 1
      %p224 = por %p222, %p223
      %p225 = scmp.ne.s32.totalorder %s214, %s215
      %p226 = scmp.eq.s32.totalorder %s27, 0
      %p227 = por %p225, %p226
      %p228 = scmp.ne.s32.totalorder %s214, %s215
      %p229 = scmp.eq.s32.totalorder %s28, 1
      %p230 = por %p228, %p229
      %p232 = scmp.ne.s32.totalorder %s215, %s231
      %p233 = scmp.eq.s32.totalorder %s28, 0
      %p234 = por %p232, %p233
      %s235 = ssub.s32 %s30, %s37
      %p236 = scmp.eq.s32.totalorder %s235, 0
      %s238 = sadd.s32 %s237, 1
      %s239 = scalar_select %p236, %s237, %s238
      %p242 = pneg %p236
      %p243 = scmp.eq.s32.totalorder %s22, 1
      %p244 = por %p242, %p243
      %p245 = scmp.ne.s32.totalorder %s237, %s240
      %p246 = scmp.eq.s32.totalorder %s22, 0
      %p247 = por %p245, %p246
      %p248 = scmp.ne.s32.totalorder %s237, %s240
      %p249 = scmp.eq.s32.totalorder %s27, 1
      %p250 = por %p248, %p249
      %p251 = scmp.ne.s32.totalorder %s240, %s241
      %p252 = scmp.eq.s32.totalorder %s27, 0
      %p253 = por %p251, %p252
      %p254 = scmp.ne.s32.totalorder %s240, %s241
      %p255 = scmp.eq.s32.totalorder %s28, 1
      %p256 = por %p254, %p255
      %p258 = scmp.ne.s32.totalorder %s241, %s257
      %p259 = scmp.eq.s32.totalorder %s28, 0
      %p260 = por %p258, %p259
      %s262 = sadd.s32 %s261, 1
      %p265 = scmp.eq.s32.totalorder %s22, 1
      %p266 = scmp.ne.s32.totalorder %s261, %s263
      %p267 = scmp.eq.s32.totalorder %s22, 0
      %p268 = por %p266, %p267
      %p269 = scmp.ne.s32.totalorder %s261, %s263
      %p270 = scmp.eq.s32.totalorder %s27, 1
      %p271 = por %p269, %p270
      %p272 = scmp.ne.s32.totalorder %s263, %s264
      %p273 = scmp.eq.s32.totalorder %s27, 0
      %p274 = por %p272, %p273
      %p275 = scmp.ne.s32.totalorder %s263, %s264
      %p276 = scmp.eq.s32.totalorder %s28, 1
      %p277 = por %p275, %p276
      %p279 = scmp.ne.s32.totalorder %s264, %s278
      %p280 = scmp.eq.s32.totalorder %s28, 0
      %p281 = por %p279, %p280
      %s282 = ssub.s32 %s29, %s41
      %p283 = scmp.eq.s32.totalorder %s282, 0
      %s285 = sadd.s32 %s284, 1
      %s286 = scalar_select %p283, %s284, %s285
      %p289 = pneg %p283
      %p290 = scmp.eq.s32.totalorder %s22, 1
      %p291 = por %p289, %p290
      %p292 = scmp.ne.s32.totalorder %s284, %s287
      %p293 = scmp.eq.s32.totalorder %s22, 0
      %p294 = por %p292, %p293
      %p295 = scmp.ne.s32.totalorder %s284, %s287
      %p296 = scmp.eq.s32.totalorder %s27, 1
      %p297 = por %p295, %p296
      %p298 = scmp.ne.s32.totalorder %s287, %s288
      %p299 = scmp.eq.s32.totalorder %s27, 0
      %p300 = por %p298, %p299
      %p301 = scmp.ne.s32.totalorder %s287, %s288
      %p302 = scmp.eq.s32.totalorder %s28, 1
      %p303 = por %p301, %p302
      %p305 = scmp.ne.s32.totalorder %s288, %s304
      %p306 = scmp.eq.s32.totalorder %s28, 0
      %p307 = por %p305, %p306
      %p308 = scmp.le.s32.totalorder 1, %s22
      %p309 = scmp.lt.s32.totalorder %s22, 3
      %p310 = pnand %p308, %p309
      %p311 = pneg %p310
      // Predicated region
      $region9: #{tpu_custom_call.1} parent=5 // pred_check
        _
      $region10: #{tpu_custom_call.1} parent=5 // pred_check_branch
        %313 = sbr.rel (%p310) target = $region12
      $region11: #{tpu_custom_call.1} parent=5 // pred_region
        %s314 = ssub.s32 %s22, 1
        // Predicated region
        $region13: #{tpu_custom_call.1} parent=11 // pred_check
          %p315 = pneg %p55
        $region14: #{tpu_custom_call.1} parent=11 // pred_check_branch
          %317 = sbr.rel (%p315) target = $region16
        $region15: #{tpu_custom_call.1} parent=11 // pred_region
          _
        $region16: #{tpu_custom_call.1} parent=11 // pred_fallthru
          _
        // Predicated region
        $region17: #{tpu_custom_call.1} parent=11 // pred_check
          %p318 = pneg %p76
        $region18: #{tpu_custom_call.1} parent=11 // pred_check_branch
          %320 = sbr.rel (%p318) target = $region20
        $region19: #{tpu_custom_call.1} parent=11 // pred_region
          %s322 = ssub.s32 2048, 2048
          %323 = vsyncadd [#allocation3], %s322
          %s324 = sshll.u32 [#allocation2], 4
          %s325 = int_to_ptr.vmem [resolvable:$true] %s324
          %330 = dma.hbm_to_vmem [thread:$0]  %s1, 2048, %s325, [#allocation3], 128, 128, 8
        $region20: #{tpu_custom_call.1} parent=11 // pred_fallthru
          _
        // Predicated region
        $region21: #{tpu_custom_call.1} parent=11 // pred_check
          %p331 = pneg %p97
        $region22: #{tpu_custom_call.1} parent=11 // pred_check_branch
          %333 = sbr.rel (%p331) target = $region24
        $region23: #{tpu_custom_call.1} parent=11 // pred_region
          _
        $region24: #{tpu_custom_call.1} parent=11 // pred_fallthru
          _
        // Predicated region
        $region25: #{tpu_custom_call.1} parent=11 // pred_check
          %p334 = pneg %p274
        $region26: #{tpu_custom_call.1} parent=11 // pred_check_branch
          %336 = sbr.rel (%p334) target = $region28
        $region27: #{tpu_custom_call.1} parent=11 // pred_region
          %s338 = ssub.s32 32, 32
          %339 = vsyncadd [#allocation5], %s338
          %s341 = sshll.u32 %s9, 4
          %s342 = int_to_ptr.vmem [resolvable:$true] %s341
          %344 = dma.vmem_to_smem %s342, 32, [#allocation8], [#allocation5]
        $region28: #{tpu_custom_call.1} parent=11 // pred_fallthru
          _
      $region12: #{tpu_custom_call.1} parent=5 // pred_fallthru
        _
      %p345 = scmp.lt.s32.totalorder %s22, 2
      // Predicated region
      $region29: #{tpu_custom_call.1} parent=5 // pred_check
        %p346 = pneg %p345
      $region30: #{tpu_custom_call.1} parent=5 // pred_check_branch
        %348 = sbr.rel (%p346) target = $region32
      $region31: #{tpu_custom_call.1} parent=5 // pred_region
        // Predicated region
        $region33: #{tpu_custom_call.1} parent=31 // pred_check
          %p349 = pneg %p117
        $region34: #{tpu_custom_call.1} parent=31 // pred_check_branch
          %351 = sbr.rel (%p349) target = $region36
        $region35: #{tpu_custom_call.1} parent=31 // pred_region
          %s352 = sand.u32 %s107, 1
          %s353 = scalar_lea.sflag [#allocation7], %s352
          %s354 = sand.u32 %s107, 1
          %s355 = smul.addr %s354, 128
          %s356 = scalar_lea.vmem [#allocation6], %s355
          %s358 = ssub.s32 2048, 2048
          %359 = vsyncadd %s353, %s358
          %s360 = smul.addr %s30, 16
          %s361 = smul.addr %s360, 128
          %s362 = scalar_lea.hbm %s3, %s361
          %s363 = sshll.u32 %s356, 4
          %s364 = int_to_ptr.vmem [resolvable:$true] %s363
          %369 = dma.hbm_to_vmem [thread:$0]  %s362, 2048, %s364, %s353, 128, 128, 8
        $region36: #{tpu_custom_call.1} parent=31 // pred_fallthru
          _
        // Predicated region
        $region37: #{tpu_custom_call.1} parent=31 // pred_check
          %p370 = pneg %p143
        $region38: #{tpu_custom_call.1} parent=31 // pred_check_branch
          %372 = sbr.rel (%p370) target = $region40
        $region39: #{tpu_custom_call.1} parent=31 // pred_region
          %p373 = scmp.lt.s32.totalorder %s30, 1
          %s374 = scalar_select %p373, %s30, 1
          %s375 = smul.addr %s374, 8
          %s376 = scalar_lea.vmem %s4, %s375
        $region40: #{tpu_custom_call.1} parent=31 // pred_fallthru
          _
        // Predicated region
        $region41: #{tpu_custom_call.1} parent=31 // pred_check
          %p377 = pneg %p169
        $region42: #{tpu_custom_call.1} parent=31 // pred_check_branch
          %379 = sbr.rel (%p377) target = $region44
        $region43: #{tpu_custom_call.1} parent=31 // pred_region
          %p380 = scmp.lt.s32.totalorder %s30, 1
          %s381 = scalar_select %p380, %s30, 1
          %s382 = scalar_lea.vmem %s5, %s381
        $region44: #{tpu_custom_call.1} parent=31 // pred_fallthru
          _
        // Predicated region
        $region45: #{tpu_custom_call.1} parent=31 // pred_check
          %p383 = pneg %p195
        $region46: #{tpu_custom_call.1} parent=31 // pred_check_branch
          %385 = sbr.rel (%p383) target = $region48
        $region47: #{tpu_custom_call.1} parent=31 // pred_region
          %p386 = scmp.lt.s32.totalorder %s30, 1
          %s387 = scalar_select %p386, %s30, 1
          %s388 = smul.addr %s387, 3
          %s389 = smul.addr %s388, 8
          %s390 = scalar_lea.vmem %s6, %s389
        $region48: #{tpu_custom_call.1} parent=31 // pred_fallthru
          _
        // Predicated region
        $region49: #{tpu_custom_call.1} parent=31 // pred_check
          %p391 = pneg %p221
        $region50: #{tpu_custom_call.1} parent=31 // pred_check_branch
          %393 = sbr.rel (%p391) target = $region52
        $region51: #{tpu_custom_call.1} parent=31 // pred_region
          %p394 = scmp.lt.s32.totalorder %s30, 1
          %s395 = scalar_select %p394, %s30, 1
          %s396 = smul.addr %s395, 3
          %s397 = smul.addr %s396, 8
          %s398 = scalar_lea.vmem %s7, %s397
        $region52: #{tpu_custom_call.1} parent=31 // pred_fallthru
          _
        // Predicated region
        $region53: #{tpu_custom_call.1} parent=31 // pred_check
          %p399 = pneg %p247
        $region54: #{tpu_custom_call.1} parent=31 // pred_check_branch
          %401 = sbr.rel (%p399) target = $region56
        $region55: #{tpu_custom_call.1} parent=31 // pred_region
          %p402 = scmp.lt.s32.totalorder %s30, 1
          %s403 = scalar_select %p402, %s30, 1
          %s404 = scalar_lea.vmem %s8, %s403
        $region56: #{tpu_custom_call.1} parent=31 // pred_fallthru
          _
      $region32: #{tpu_custom_call.1} parent=5 // pred_fallthru
        _
      %p405 = scmp.le.s32.totalorder 1, %s22
      %p406 = scmp.lt.s32.totalorder %s22, 3
      %p407 = pnand %p405, %p406
      %p408 = pneg %p407
      // Predicated region
      $region57: #{tpu_custom_call.1} parent=5 // pred_check
        _
      $region58: #{tpu_custom_call.1} parent=5 // pred_check_branch
        %410 = sbr.rel (%p407) target = $region60
      $region59: #{tpu_custom_call.1} parent=5 // pred_region
        %s411 = ssub.s32 %s22, 1
        // Predicated region
        $region61: #{tpu_custom_call.1} parent=59 // pred_check
          %p412 = pneg %p76
        $region62: #{tpu_custom_call.1} parent=59 // pred_check_branch
          %414 = sbr.rel (%p412) target = $region64
        $region63: #{tpu_custom_call.1} parent=59 // pred_region
          %415 = dma.done [#allocation3], 2048
        $region64: #{tpu_custom_call.1} parent=59 // pred_fallthru
          _
        %s416 = sand.u32 %s110, 1
        %s417 = scalar_lea.sflag [#allocation7], %s416
        %s418 = sand.u32 %s110, 1
        %s419 = smul.addr %s418, 128
        %s420 = scalar_lea.vmem [#allocation6], %s419
        // Predicated region
        $region65: #{tpu_custom_call.1} parent=59 // pred_check
          %p421 = pneg %p123
        $region66: #{tpu_custom_call.1} parent=59 // pred_check_branch
          %423 = sbr.rel (%p421) target = $region68
        $region67: #{tpu_custom_call.1} parent=59 // pred_region
          %424 = dma.done %s417, 2048
        $region68: #{tpu_custom_call.1} parent=59 // pred_fallthru
          _
        // Predicated region
        $region69: #{tpu_custom_call.1} parent=59 // pred_check
          %p425 = pneg %p274
        $region70: #{tpu_custom_call.1} parent=59 // pred_check_branch
          %427 = sbr.rel (%p425) target = $region72
        $region71: #{tpu_custom_call.1} parent=59 // pred_region
          %428 = dma.done [#allocation5], 32
        $region72: #{tpu_custom_call.1} parent=59 // pred_fallthru
          _
        %429 = sfence
        %p430 = pneg %p55
        %p431 = pneg %p52
        %p432 = pneg %p76
        %p433 = pneg %p73
        %p434 = pneg %p97
        %p435 = pneg %p94
        %s436 = sand.u32 %s110, 1
        %s437 = scalar_lea.sflag [#allocation7], %s436
        %s438 = sand.u32 %s110, 1
        %s439 = smul.addr %s438, 128
        %s440 = scalar_lea.vmem [#allocation6], %s439
        %p441 = pneg %p123
        %p442 = pneg %p120
        %p443 = scmp.lt.s32.totalorder %s32, 1
        %s444 = scalar_select %p443, %s32, 1
        %s445 = smul.addr %s444, 8
        %s446 = scalar_lea.vmem %s4, %s445
        %p447 = pneg %p149
        %p448 = pneg %p146
        %p449 = scmp.lt.s32.totalorder %s32, 1
        %s450 = scalar_select %p449, %s32, 1
        %s451 = scalar_lea.vmem %s5, %s450
        %p452 = pneg %p175
        %p453 = pneg %p172
        %p454 = scmp.lt.s32.totalorder %s32, 1
        %s455 = scalar_select %p454, %s32, 1
        %s456 = smul.addr %s455, 3
        %s457 = smul.addr %s456, 8
        %s458 = scalar_lea.vmem %s6, %s457
        %p459 = pneg %p201
        %p460 = pneg %p198
        %p461 = scmp.lt.s32.totalorder %s32, 1
        %s462 = scalar_select %p461, %s32, 1
        %s463 = smul.addr %s462, 3
        %s464 = smul.addr %s463, 8
        %s465 = scalar_lea.vmem %s7, %s464
        %p466 = pneg %p227
        %p467 = pneg %p224
        %p468 = scmp.lt.s32.totalorder %s32, 1
        %s469 = scalar_select %p468, %s32, 1
        %s470 = scalar_lea.vmem %s8, %s469
        %p471 = pneg %p253
        %p472 = pneg %p250
        %p473 = pneg %p274
        %p474 = pneg %p271
        %p475 = pneg %p300
        %p476 = pneg %p297
        %p477 = scmp.lt.s32.totalorder %s32, 1
        %s478 = scalar_select %p477, %s32, 1
        %s479 = smul.addr %s478, 8
        %s480 = scalar_lea.vmem %s4, %s479
        %p481 = scmp.lt.s32.totalorder %s32, 1
        %s482 = scalar_select %p481, %s32, 1
        %s483 = scalar_lea.vmem %s5, %s482
        %p484 = scmp.lt.s32.totalorder %s32, 1
        %s485 = scalar_select %p484, %s32, 1
        %s486 = smul.addr %s485, 3
        %s487 = smul.addr %s486, 8
        %s488 = scalar_lea.vmem %s6, %s487
        %p489 = scmp.lt.s32.totalorder %s32, 1
        %s490 = scalar_select %p489, %s32, 1
        %s491 = smul.addr %s490, 3
        %s492 = smul.addr %s491, 8
        %s493 = scalar_lea.vmem %s7, %s492
        %p494 = scmp.lt.s32.totalorder %s32, 1
        %s495 = scalar_select %p494, %s32, 1
        %s496 = scalar_lea.vmem %s8, %s495
        %s497 = smul.u32 2, %s31
        %p498 = scmp.eq.s32.totalorder %s32, 0
        // Predicated region
        $region73: #{tpu_custom_call.1} parent=59 // pred_check
          %p499 = pneg %p498
        $region74: #{tpu_custom_call.1} parent=59 // pred_check_branch
          %501 = sbr.rel (%p499) target = $region76
        $region75: #{tpu_custom_call.1} parent=59 // pred_region
          %v502 = vld [vmem:[%s0] sm:$0xff]
          %v503 = vld [vmem:[%s0 + $0x8] sm:$0xff]
          %v504 = vld [vmem:[#allocation2] sm:$0xff]
          %v505 = vld [vmem:[#allocation2 + $0x8] sm:$0xff]
          %v506 = vld [vmem:[#allocation2 + $0x10] sm:$0xff]
          %v507 = vld [vmem:[#allocation2 + $0x18] sm:$0xff]
          %v508 = vld [vmem:[#allocation2 + $0x20] sm:$0xff]
          %v509 = vld [vmem:[#allocation2 + $0x28] sm:$0xff]
          %v510 = vld [vmem:[#allocation2 + $0x30] sm:$0xff]
          %v511 = vld [vmem:[#allocation2 + $0x38] sm:$0xff]
          %v512 = vld [vmem:[#allocation2 + $0x40] sm:$0xff]
          %v513 = vld [vmem:[#allocation2 + $0x48] sm:$0xff]
          %v514 = vld [vmem:[#allocation2 + $0x50] sm:$0xff]
          %v515 = vld [vmem:[#allocation2 + $0x58] sm:$0xff]
          %v516 = vld [vmem:[#allocation2 + $0x60] sm:$0xff]
          %v517 = vld [vmem:[#allocation2 + $0x68] sm:$0xff]
          %v518 = vld [vmem:[#allocation2 + $0x70] sm:$0xff]
          %v519 = vld [vmem:[#allocation2 + $0x78] sm:$0xff]
          %v520 = vld [vmem:[%s2] sm:$0x1]
          %v522 = vlaneseq
          %v523 = vshrl.u32 %v522, 7
          %v524 = vsub.s32 0, %v523
          %v525 = vrot.slane %v520, %v524
          %527 = vmatprep.subr.mxu0 0.0
          %528 = vmatpush1.msra.mxu0 %v519
          %529 = vmatprep.subr.mxu0 0.0
          %530 = vmatpush1.msra.mxu0 %v518
          %531 = vmatprep.subr.mxu0 0.0
          %532 = vmatpush1.msra.mxu0 %v517
          %533 = vmatprep.subr.mxu0 0.0
          %534 = vmatpush1.msra.mxu0 %v516
          %535 = vmatprep.subr.mxu0 0.0
          %536 = vmatpush1.msra.mxu0 %v515
          %537 = vmatprep.subr.mxu0 0.0
          %538 = vmatpush1.msra.mxu0 %v514
          %539 = vmatprep.subr.mxu0 0.0
          %540 = vmatpush1.msra.mxu0 %v513
          %541 = vmatprep.subr.mxu0 0.0
          %542 = vmatpush1.msra.mxu0 %v512
          %543 = vmatprep.subr.mxu0 0.0
          %544 = vmatpush1.msra.mxu0 %v511
          %545 = vmatprep.subr.mxu0 0.0
          %546 = vmatpush1.msra.mxu0 %v510
          %547 = vmatprep.subr.mxu0 0.0
          %548 = vmatpush1.msra.mxu0 %v509
          %549 = vmatprep.subr.mxu0 0.0
          %550 = vmatpush1.msra.mxu0 %v508
          %551 = vmatprep.subr.mxu0 0.0
          %552 = vmatpush1.msra.mxu0 %v507
          %553 = vmatprep.subr.mxu0 0.0
          %554 = vmatpush1.msra.mxu0 %v506
          %555 = vmatprep.subr.mxu0 0.0
          %556 = vmatpush1.msra.mxu0 %v505
          %557 = vmatprep.subr.mxu0 0.0
          %558 = vmatpush1.msra.mxu0 %v504
          %559 = vmatprep.subr.mxu0 0.0
          %560 = vmatpush2.msra.mxu0 0.0
          %561 = vmatprep.subr.mxu0 0.0
          %562 = vmatpush2.msra.mxu0 0.0
          %563 = vmatprep.subr.mxu0 0.0
          %564 = vmatpush2.msra.mxu0 0.0
          %565 = vmatprep.subr.mxu0 0.0
          %566 = vmatpush2.msra.mxu0 0.0
          %567 = vmatprep.subr.mxu0 0.0
          %568 = vmatpush2.msra.mxu0 0.0
          %569 = vmatprep.subr.mxu0 0.0
          %570 = vmatpush2.msra.mxu0 0.0
          %571 = vmatprep.subr.mxu0 0.0
          %572 = vmatpush2.msra.mxu0 0.0
          %573 = vmatprep.subr.mxu0 0.0
          %574 = vmatpush2.msra.mxu0 0.0
          %575 = vmatprep.subr.mxu0 0.0
          %576 = vmatpush2.msra.mxu0 0.0
          %577 = vmatprep.subr.mxu0 0.0
          %578 = vmatpush2.msra.mxu0 0.0
          %579 = vmatprep.subr.mxu0 0.0
          %580 = vmatpush2.msra.mxu0 0.0
          %581 = vmatprep.subr.mxu0 0.0
          %582 = vmatpush2.msra.mxu0 0.0
          %583 = vmatprep.subr.mxu0 0.0
          %584 = vmatpush2.msra.mxu0 0.0
          %585 = vmatprep.subr.mxu0 0.0
          %586 = vmatpush2.msra.mxu0 0.0
          %587 = vmatprep.subr.mxu0 0.0
          %588 = vmatpush2.msra.mxu0 0.0
          %589 = vmatprep.subr.mxu0 0.0
          %590 = vmatpush2.msra.mxu0 0.0
          %591 = vmatprep.mubr.f32.mxu0 0.0
          %592 = vmatmul.mubr.f32.gmra.mxu0 %v502
          %v593 = vpop.f32.mrf.mxu0
          %v594 = vadd.f32 %v525, %v593
          %v595 = vpop.f32.mrf.mxu0
          %596 = vmatprep.mubr.f32.mxu0 0.0
          %597 = vmatmul.mubr.f32.gmra.mxu0 %v503
          %v598 = vpop.f32.mrf.mxu0
          %v599 = vadd.f32 %v525, %v598
          %v600 = vpop.f32.mrf.mxu0
          %601 = vdwg.mxu0
          %602 = vst [vmem:[#allocation9] sm:$0xff] %v594
          %603 = vst [vmem:[#allocation9 + $0x8] sm:$0xff] %v599
        $region76: #{tpu_custom_call.1} parent=59 // pred_fallthru
          _
        %v604 = vld [vmem:[%s0] sm:$0xff]
        %v605 = vld [vmem:[%s0 + $0x8] sm:$0xff]
        %v606 = vld [vmem:[%s420] sm:$0xff]
        %v607 = vld [vmem:[%s420 + $0x8] sm:$0xff]
        %v608 = vld [vmem:[%s420 + $0x10] sm:$0xff]
        %v609 = vld [vmem:[%s420 + $0x18] sm:$0xff]
        %v610 = vld [vmem:[%s420 + $0x20] sm:$0xff]
        %v611 = vld [vmem:[%s420 + $0x28] sm:$0xff]
        %v612 = vld [vmem:[%s420 + $0x30] sm:$0xff]
        %v613 = vld [vmem:[%s420 + $0x38] sm:$0xff]
        %v614 = vld [vmem:[%s420 + $0x40] sm:$0xff]
        %v615 = vld [vmem:[%s420 + $0x48] sm:$0xff]
        %v616 = vld [vmem:[%s420 + $0x50] sm:$0xff]
        %v617 = vld [vmem:[%s420 + $0x58] sm:$0xff]
        %v618 = vld [vmem:[%s420 + $0x60] sm:$0xff]
        %v619 = vld [vmem:[%s420 + $0x68] sm:$0xff]
        %v620 = vld [vmem:[%s420 + $0x70] sm:$0xff]
        %v621 = vld [vmem:[%s420 + $0x78] sm:$0xff]
        %622 = vmatprep.subr.mxu0 0.0
        %623 = vmatpush1.msra.mxu0 %v621
        %624 = vmatprep.subr.mxu0 0.0
        %625 = vmatpush1.msra.mxu0 %v620
        %626 = vmatprep.subr.mxu0 0.0
        %627 = vmatpush1.msra.mxu0 %v619
        %628 = vmatprep.subr.mxu0 0.0
        %629 = vmatpush1.msra.mxu0 %v618
        %630 = vmatprep.subr.mxu0 0.0
        %631 = vmatpush1.msra.mxu0 %v617
        %632 = vmatprep.subr.mxu0 0.0
        %633 = vmatpush1.msra.mxu0 %v616
        %634 = vmatprep.subr.mxu0 0.0
        %635 = vmatpush1.msra.mxu0 %v615
        %636 = vmatprep.subr.mxu0 0.0
        %637 = vmatpush1.msra.mxu0 %v614
        %638 = vmatprep.subr.mxu0 0.0
        %639 = vmatpush1.msra.mxu0 %v613
        %640 = vmatprep.subr.mxu0 0.0
        %641 = vmatpush1.msra.mxu0 %v612
        %642 = vmatprep.subr.mxu0 0.0
        %643 = vmatpush1.msra.mxu0 %v611
        %644 = vmatprep.subr.mxu0 0.0
        %645 = vmatpush1.msra.mxu0 %v610
        %646 = vmatprep.subr.mxu0 0.0
        %647 = vmatpush1.msra.mxu0 %v609
        %648 = vmatprep.subr.mxu0 0.0
        %649 = vmatpush1.msra.mxu0 %v608
        %650 = vmatprep.subr.mxu0 0.0
        %651 = vmatpush1.msra.mxu0 %v607
        %652 = vmatprep.subr.mxu0 0.0
        %653 = vmatpush1.msra.mxu0 %v606
        %654 = vmatprep.subr.mxu0 0.0
        %655 = vmatpush2.msra.mxu0 0.0
        %656 = vmatprep.subr.mxu0 0.0
        %657 = vmatpush2.msra.mxu0 0.0
        %658 = vmatprep.subr.mxu0 0.0
        %659 = vmatpush2.msra.mxu0 0.0
        %660 = vmatprep.subr.mxu0 0.0
        %661 = vmatpush2.msra.mxu0 0.0
        %662 = vmatprep.subr.mxu0 0.0
        %663 = vmatpush2.msra.mxu0 0.0
        %664 = vmatprep.subr.mxu0 0.0
        %665 = vmatpush2.msra.mxu0 0.0
        %666 = vmatprep.subr.mxu0 0.0
        %667 = vmatpush2.msra.mxu0 0.0
        %668 = vmatprep.subr.mxu0 0.0
        %669 = vmatpush2.msra.mxu0 0.0
        %670 = vmatprep.subr.mxu0 0.0
        %671 = vmatpush2.msra.mxu0 0.0
        %672 = vmatprep.subr.mxu0 0.0
        %673 = vmatpush2.msra.mxu0 0.0
        %674 = vmatprep.subr.mxu0 0.0
        %675 = vmatpush2.msra.mxu0 0.0
        %676 = vmatprep.subr.mxu0 0.0
        %677 = vmatpush2.msra.mxu0 0.0
        %678 = vmatprep.subr.mxu0 0.0
        %679 = vmatpush2.msra.mxu0 0.0
        %680 = vmatprep.subr.mxu0 0.0
        %681 = vmatpush2.msra.mxu0 0.0
        %682 = vmatprep.subr.mxu0 0.0
        %683 = vmatpush2.msra.mxu0 0.0
        %684 = vmatprep.subr.mxu0 0.0
        %685 = vmatpush2.msra.mxu0 0.0
        %686 = vmatprep.mubr.f32.mxu0 0.0
        %687 = vmatmul.mubr.f32.gmra.mxu0 %v604
        %v688 = vpop.f32.mrf.mxu0
        %v689 = vadd.f32 0.0, %v688
        %v690 = vpop.f32.mrf.mxu0
        %691 = vmatprep.mubr.f32.mxu0 0.0
        %692 = vmatmul.mubr.f32.gmra.mxu0 %v605
        %v693 = vpop.f32.mrf.mxu0
        %v694 = vadd.f32 0.0, %v693
        %v695 = vpop.f32.mrf.mxu0
        %696 = vdwg.mxu0
        %v697 = vld [vmem:[%s480] sm:$0xff]
        %v698 = vld [vmem:[%s483] sm:$0x1]
        %v699 = vld [vmem:[%s488] sm:$0xff]
        %v700 = vld [vmem:[%s488 + $0x8] sm:$0xff]
        %v701 = vld [vmem:[%s488 + $0x10] sm:$0xff]
        %v702 = vld [vmem:[%s493] sm:$0xff]
        %v703 = vld [vmem:[%s493 + $0x8] sm:$0xff]
        %v704 = vld [vmem:[%s493 + $0x10] sm:$0xff]
        %v705 = vlaneseq
        %v706 = vand.u32 %v705, 127
        %707 = vset.pattern.permute.xlu0 0
        %708 = vperm.xlu0 %707, %v699
        %v709 = vpop.permute.xlu0 %708
        %710 = vset.pattern.permute.xlu0 0
        %711 = vperm.xlu0 %710, %v700
        %v712 = vpop.permute.xlu0 %711
        %713 = vset.pattern.permute.xlu0 0
        %714 = vperm.xlu0 %713, %v701
        %v715 = vpop.permute.xlu0 %714
        %vm716 = vcmp.eq.s32.totalorder %v706, %v709
        %vm717 = vcmp.eq.s32.totalorder %v706, %v712
        %vm718 = vcmp.eq.s32.totalorder %v706, %v715
        %v719 = vsel %vm716, 1, 0
        %v720 = vsel %vm717, 1, 0
        %v721 = vsel %vm718, 1, 0
        %v722 = vcvt.s32.f32 %v719
        %v723 = vcvt.s32.f32 %v720
        %v724 = vcvt.s32.f32 %v721
        %725 = vset.pattern.permute.xlu0 0
        %726 = vperm.xlu0 %725, %v702
        %v727 = vpop.permute.xlu0 %726
        %728 = vset.pattern.permute.xlu0 0
        %729 = vperm.xlu0 %728, %v703
        %v730 = vpop.permute.xlu0 %729
        %731 = vset.pattern.permute.xlu0 0
        %732 = vperm.xlu0 %731, %v704
        %v733 = vpop.permute.xlu0 %732
        %vm734 = vcmp.eq.s32.totalorder %v706, %v727
        %vm735 = vcmp.eq.s32.totalorder %v706, %v730
        %vm736 = vcmp.eq.s32.totalorder %v706, %v733
        %v737 = vsel %vm734, 1, 0
        %v738 = vsel %vm735, 1, 0
        %v739 = vsel %vm736, 1, 0
        %v740 = vcvt.s32.f32 %v737
        %v741 = vcvt.s32.f32 %v738
        %v742 = vcvt.s32.f32 %v739
        %vm743 = vcmask 64512
        %v745 = vsel %vm743, %v740, 0
        %v748 = vsel %vm743, %v741, 0
        %v751 = vsel %vm743, %v742, 0
        %753 = vmatprep.subr.mxu0 0.0
        %754 = vmatpush1.msra.mxu0 0.0
        %755 = vmatprep.subr.mxu0 0.0
        %756 = vmatpush1.msra.mxu0 0.0
        %757 = vmatprep.subr.mxu0 0.0
        %758 = vmatpush1.msra.mxu0 0.0
        %759 = vmatprep.subr.mxu0 0.0
        %760 = vmatpush1.msra.mxu0 0.0
        %761 = vmatprep.subr.mxu0 0.0
        %762 = vmatpush1.msra.mxu0 0.0
        %763 = vmatprep.subr.mxu0 0.0
        %764 = vmatpush1.msra.mxu0 0.0
        %765 = vmatprep.subr.mxu0 0.0
        %766 = vmatpush1.msra.mxu0 0.0
        %767 = vmatprep.subr.mxu0 0.0
        %768 = vmatpush1.msra.mxu0 0.0
        %769 = vmatprep.subr.mxu0 0.0
        %770 = vmatpush1.msra.mxu0 0.0
        %771 = vmatprep.subr.mxu0 0.0
        %772 = vmatpush1.msra.mxu0 0.0
        %773 = vmatprep.subr.mxu0 0.0
        %774 = vmatpush1.msra.mxu0 0.0
        %775 = vmatprep.subr.mxu0 0.0
        %776 = vmatpush1.msra.mxu0 0.0
        %777 = vmatprep.subr.mxu0 0.0
        %778 = vmatpush1.msra.mxu0 0.0
        %779 = vmatprep.subr.mxu0 0.0
        %780 = vmatpush1.msra.mxu0 0.0
        %781 = vmatprep.subr.mxu0 0.0
        %782 = vmatpush1.msra.mxu0 0.0
        %783 = vmatprep.subr.mxu0 0.0
        %784 = vmatpush1.msra.mxu0 %v697
        %785 = vmatprep.subr.mxu0 0.0
        %786 = vmatpush2.msra.mxu0 0.0
        %787 = vmatprep.subr.mxu0 0.0
        %788 = vmatpush2.msra.mxu0 0.0
        %789 = vmatprep.subr.mxu0 0.0
        %790 = vmatpush2.msra.mxu0 0.0
        %791 = vmatprep.subr.mxu0 0.0
        %792 = vmatpush2.msra.mxu0 0.0
        %793 = vmatprep.subr.mxu0 0.0
        %794 = vmatpush2.msra.mxu0 0.0
        %795 = vmatprep.subr.mxu0 0.0
        %796 = vmatpush2.msra.mxu0 0.0
        %797 = vmatprep.subr.mxu0 0.0
        %798 = vmatpush2.msra.mxu0 0.0
        %799 = vmatprep.subr.mxu0 0.0
        %800 = vmatpush2.msra.mxu0 0.0
        %801 = vmatprep.subr.mxu0 0.0
        %802 = vmatpush2.msra.mxu0 0.0
        %803 = vmatprep.subr.mxu0 0.0
        %804 = vmatpush2.msra.mxu0 0.0
        %805 = vmatprep.subr.mxu0 0.0
        %806 = vmatpush2.msra.mxu0 0.0
        %807 = vmatprep.subr.mxu0 0.0
        %808 = vmatpush2.msra.mxu0 0.0
        %809 = vmatprep.subr.mxu0 0.0
        %810 = vmatpush2.msra.mxu0 0.0
        %811 = vmatprep.subr.mxu0 0.0
        %812 = vmatpush2.msra.mxu0 0.0
        %813 = vmatprep.subr.mxu0 0.0
        %814 = vmatpush2.msra.mxu0 0.0
        %815 = vmatprep.subr.mxu0 0.0
        %816 = vmatpush2.msra.mxu0 0.0
        %817 = vmatprep.mubr.f32.mxu0 0.0
        %818 = vmatmul.mubr.f32.gmra.mxu0 %v745
        %v819 = vpop.f32.mrf.mxu0
        %v820 = vadd.f32 0.0, %v819
        %v821 = vpop.f32.mrf.mxu0
        %822 = vmatprep.mubr.f32.mxu0 0.0
        %823 = vmatmul.mubr.f32.gmra.mxu0 %v748
        %v824 = vpop.f32.mrf.mxu0
        %v825 = vadd.f32 0.0, %v824
        %v826 = vpop.f32.mrf.mxu0
        %827 = vmatprep.mubr.f32.mxu0 0.0
        %828 = vmatmul.mubr.f32.gmra.mxu0 %v751
        %v829 = vpop.f32.mrf.mxu0
        %v830 = vadd.f32 0.0, %v829
        %v831 = vpop.f32.mrf.mxu0
        %832 = vdwg.mxu0
        %vm833 = vcmask 130048
        %v835 = vsel %vm833, %v722, 0
        %v838 = vsel %vm833, %v723, 0
        %v841 = vsel %vm833, %v724, 0
        %843 = vmatprep.subr.mxu0 0.0
        %844 = vmatpush1.msra.mxu0 0.0
        %845 = vmatprep.subr.mxu0 0.0
        %846 = vmatpush1.msra.mxu0 0.0
        %847 = vmatprep.subr.mxu0 0.0
        %848 = vmatpush1.msra.mxu0 0.0
        %849 = vmatprep.subr.mxu0 0.0
        %850 = vmatpush1.msra.mxu0 0.0
        %851 = vmatprep.subr.mxu0 0.0
        %852 = vmatpush1.msra.mxu0 0.0
        %853 = vmatprep.subr.mxu0 0.0
        %854 = vmatpush1.msra.mxu0 0.0
        %855 = vmatprep.subr.mxu0 0.0
        %856 = vmatpush1.msra.mxu0 0.0
        %857 = vmatprep.subr.mxu0 0.0
        %858 = vmatpush1.msra.mxu0 0.0
        %859 = vmatprep.subr.mxu0 0.0
        %860 = vmatpush1.msra.mxu0 0.0
        %861 = vmatprep.subr.mxu0 0.0
        %862 = vmatpush1.msra.mxu0 0.0
        %863 = vmatprep.subr.mxu0 0.0
        %864 = vmatpush1.msra.mxu0 0.0
        %865 = vmatprep.subr.mxu0 0.0
        %866 = vmatpush1.msra.mxu0 0.0
        %867 = vmatprep.subr.mxu0 0.0
        %868 = vmatpush1.msra.mxu0 0.0
        %869 = vmatprep.subr.mxu0 0.0
        %870 = vmatpush1.msra.mxu0 0.0
        %871 = vmatprep.subr.mxu0 0.0
        %872 = vmatpush1.msra.mxu0 %v694
        %873 = vmatprep.subr.mxu0 0.0
        %874 = vmatpush1.msra.mxu0 %v689
        %875 = vmatprep.subr.mxu0 0.0
        %876 = vmatpush2.msra.mxu0 0.0
        %877 = vmatprep.subr.mxu0 0.0
        %878 = vmatpush2.msra.mxu0 0.0
        %879 = vmatprep.subr.mxu0 0.0
        %880 = vmatpush2.msra.mxu0 0.0
        %881 = vmatprep.subr.mxu0 0.0
        %882 = vmatpush2.msra.mxu0 0.0
        %883 = vmatprep.subr.mxu0 0.0
        %884 = vmatpush2.msra.mxu0 0.0
        %885 = vmatprep.subr.mxu0 0.0
        %886 = vmatpush2.msra.mxu0 0.0
        %887 = vmatprep.subr.mxu0 0.0
        %888 = vmatpush2.msra.mxu0 0.0
        %889 = vmatprep.subr.mxu0 0.0
        %890 = vmatpush2.msra.mxu0 0.0
        %891 = vmatprep.subr.mxu0 0.0
        %892 = vmatpush2.msra.mxu0 0.0
        %893 = vmatprep.subr.mxu0 0.0
        %894 = vmatpush2.msra.mxu0 0.0
        %895 = vmatprep.subr.mxu0 0.0
        %896 = vmatpush2.msra.mxu0 0.0
        %897 = vmatprep.subr.mxu0 0.0
        %898 = vmatpush2.msra.mxu0 0.0
        %899 = vmatprep.subr.mxu0 0.0
        %900 = vmatpush2.msra.mxu0 0.0
        %901 = vmatprep.subr.mxu0 0.0
        %902 = vmatpush2.msra.mxu0 0.0
        %903 = vmatprep.subr.mxu0 0.0
        %904 = vmatpush2.msra.mxu0 0.0
        %905 = vmatprep.subr.mxu0 0.0
        %906 = vmatpush2.msra.mxu0 0.0
        %907 = vmatprep.mubr.f32.mxu0 0.0
        %908 = vmatmul.mubr.f32.gmra.mxu0 %v835
        %v909 = vpop.f32.mrf.mxu0
        %v910 = vadd.f32 %v820, %v909
        %v911 = vpop.f32.mrf.mxu0
        %912 = vmatprep.mubr.f32.mxu0 0.0
        %913 = vmatmul.mubr.f32.gmra.mxu0 %v838
        %v914 = vpop.f32.mrf.mxu0
        %v915 = vadd.f32 %v825, %v914
        %v916 = vpop.f32.mrf.mxu0
        %917 = vmatprep.mubr.f32.mxu0 0.0
        %918 = vmatmul.mubr.f32.gmra.mxu0 %v841
        %v919 = vpop.f32.mrf.mxu0
        %v920 = vadd.f32 %v830, %v919
        %v921 = vpop.f32.mrf.mxu0
        %922 = vdwg.mxu0
        %v924 = vlaneseq
        %v925 = vshrl.u32 %v924, 7
        %v926 = vsub.s32 0, %v925
        %v927 = vrot.slane %v698, %v926
        %v929 = vadd.f32 %v910, %v927
        %v930 = vadd.f32 %v915, %v927
        %v931 = vadd.f32 %v920, %v927
        %v932 = vxor.u32 %v929, 2147483648
        %v933 = vxor.u32 %v930, 2147483648
        %v934 = vxor.u32 %v931, 2147483648
        %v935 = vmul.f32 %v932, 1.442695
        %v936 = vpow.pop %v935
        %v937 = vmul.f32 %v933, 1.442695
        %v938 = vpow.pop %v937
        %v939 = vmul.f32 %v934, 1.442695
        %v940 = vpow.pop %v939
        %v941 = vadd.f32 %v936, 1.0
        %v942 = vadd.f32 %v938, 1.0
        %v943 = vadd.f32 %v940, 1.0
        %v944 = vrcp.pop %v941
        %v945 = vmul.f32 1.0, %v944
        %v946 = vrcp.pop %v942
        %v947 = vmul.f32 1.0, %v946
        %v948 = vrcp.pop %v943
        %v949 = vmul.f32 1.0, %v948
        %950 = vset.pattern.permute.xlu0 1
        %951 = vperm.xlu0 %950, %v699
        %v952 = vpop.permute.xlu0 %951
        %953 = vset.pattern.permute.xlu0 1
        %954 = vperm.xlu0 %953, %v700
        %v955 = vpop.permute.xlu0 %954
        %956 = vset.pattern.permute.xlu0 1
        %957 = vperm.xlu0 %956, %v701
        %v958 = vpop.permute.xlu0 %957
        %vm959 = vcmp.eq.s32.totalorder %v706, %v952
        %vm960 = vcmp.eq.s32.totalorder %v706, %v955
        %vm961 = vcmp.eq.s32.totalorder %v706, %v958
        %v962 = vsel %vm959, 1, 0
        %v963 = vsel %vm960, 1, 0
        %v964 = vsel %vm961, 1, 0
        %v965 = vcvt.s32.f32 %v962
        %v966 = vcvt.s32.f32 %v963
        %v967 = vcvt.s32.f32 %v964
        %968 = vset.pattern.permute.xlu0 1
        %969 = vperm.xlu0 %968, %v702
        %v970 = vpop.permute.xlu0 %969
        %971 = vset.pattern.permute.xlu0 1
        %972 = vperm.xlu0 %971, %v703
        %v973 = vpop.permute.xlu0 %972
        %974 = vset.pattern.permute.xlu0 1
        %975 = vperm.xlu0 %974, %v704
        %v976 = vpop.permute.xlu0 %975
        %vm977 = vcmp.eq.s32.totalorder %v706, %v970
        %vm978 = vcmp.eq.s32.totalorder %v706, %v973
        %vm979 = vcmp.eq.s32.totalorder %v706, %v976
        %v980 = vsel %vm977, 1, 0
        %v981 = vsel %vm978, 1, 0
        %v982 = vsel %vm979, 1, 0
        %v983 = vcvt.s32.f32 %v980
        %v984 = vcvt.s32.f32 %v981
        %v985 = vcvt.s32.f32 %v982
        %v987 = vsel %vm743, %v983, 0
        %v990 = vsel %vm743, %v984, 0
        %v993 = vsel %vm743, %v985, 0
        %995 = vmatprep.subr.mxu0 0.0
        %996 = vmatpush1.msra.mxu0 0.0
        %997 = vmatprep.subr.mxu0 0.0
        %998 = vmatpush1.msra.mxu0 0.0
        %999 = vmatprep.subr.mxu0 0.0
        %1000 = vmatpush1.msra.mxu0 0.0
        %1001 = vmatprep.subr.mxu0 0.0
        %1002 = vmatpush1.msra.mxu0 0.0
        %1003 = vmatprep.subr.mxu0 0.0
        %1004 = vmatpush1.msra.mxu0 0.0
        %1005 = vmatprep.subr.mxu0 0.0
        %1006 = vmatpush1.msra.mxu0 0.0
        %1007 = vmatprep.subr.mxu0 0.0
        %1008 = vmatpush1.msra.mxu0 0.0
        %1009 = vmatprep.subr.mxu0 0.0
        %1010 = vmatpush1.msra.mxu0 0.0
        %1011 = vmatprep.subr.mxu0 0.0
        %1012 = vmatpush1.msra.mxu0 0.0
        %1013 = vmatprep.subr.mxu0 0.0
        %1014 = vmatpush1.msra.mxu0 0.0
        %1015 = vmatprep.subr.mxu0 0.0
        %1016 = vmatpush1.msra.mxu0 0.0
        %1017 = vmatprep.subr.mxu0 0.0
        %1018 = vmatpush1.msra.mxu0 0.0
        %1019 = vmatprep.subr.mxu0 0.0
        %1020 = vmatpush1.msra.mxu0 0.0
        %1021 = vmatprep.subr.mxu0 0.0
        %1022 = vmatpush1.msra.mxu0 0.0
        %1023 = vmatprep.subr.mxu0 0.0
        %1024 = vmatpush1.msra.mxu0 0.0
        %1025 = vmatprep.subr.mxu0 0.0
        %1026 = vmatpush1.msra.mxu0 %v697
        %1027 = vmatprep.subr.mxu0 0.0
        %1028 = vmatpush2.msra.mxu0 0.0
        %1029 = vmatprep.subr.mxu0 0.0
        %1030 = vmatpush2.msra.mxu0 0.0
        %1031 = vmatprep.subr.mxu0 0.0
        %1032 = vmatpush2.msra.mxu0 0.0
        %1033 = vmatprep.subr.mxu0 0.0
        %1034 = vmatpush2.msra.mxu0 0.0
        %1035 = vmatprep.subr.mxu0 0.0
        %1036 = vmatpush2.msra.mxu0 0.0
        %1037 = vmatprep.subr.mxu0 0.0
        %1038 = vmatpush2.msra.mxu0 0.0
        %1039 = vmatprep.subr.mxu0 0.0
        %1040 = vmatpush2.msra.mxu0 0.0
        %1041 = vmatprep.subr.mxu0 0.0
        %1042 = vmatpush2.msra.mxu0 0.0
        %1043 = vmatprep.subr.mxu0 0.0
        %1044 = vmatpush2.msra.mxu0 0.0
        %1045 = vmatprep.subr.mxu0 0.0
        %1046 = vmatpush2.msra.mxu0 0.0
        %1047 = vmatprep.subr.mxu0 0.0
        %1048 = vmatpush2.msra.mxu0 0.0
        %1049 = vmatprep.subr.mxu0 0.0
        %1050 = vmatpush2.msra.mxu0 0.0
        %1051 = vmatprep.subr.mxu0 0.0
        %1052 = vmatpush2.msra.mxu0 0.0
        %1053 = vmatprep.subr.mxu0 0.0
        %1054 = vmatpush2.msra.mxu0 0.0
        %1055 = vmatprep.subr.mxu0 0.0
        %1056 = vmatpush2.msra.mxu0 0.0
        %1057 = vmatprep.subr.mxu0 0.0
        %1058 = vmatpush2.msra.mxu0 0.0
        %1059 = vmatprep.mubr.f32.mxu0 0.0
        %1060 = vmatmul.mubr.f32.gmra.mxu0 %v987
        %v1061 = vpop.f32.mrf.mxu0
        %v1062 = vadd.f32 0.0, %v1061
        %v1063 = vpop.f32.mrf.mxu0
        %1064 = vmatprep.mubr.f32.mxu0 0.0
        %1065 = vmatmul.mubr.f32.gmra.mxu0 %v990
        %v1066 = vpop.f32.mrf.mxu0
        %v1067 = vadd.f32 0.0, %v1066
        %v1068 = vpop.f32.mrf.mxu0
        %1069 = vmatprep.mubr.f32.mxu0 0.0
        %1070 = vmatmul.mubr.f32.gmra.mxu0 %v993
        %v1071 = vpop.f32.mrf.mxu0
        %v1072 = vadd.f32 0.0, %v1071
        %v1073 = vpop.f32.mrf.mxu0
        %1074 = vdwg.mxu0
        %v1076 = vsel %vm833, %v965, 0
        %v1079 = vsel %vm833, %v966, 0
        %v1082 = vsel %vm833, %v967, 0
        %1084 = vmatprep.subr.mxu0 0.0
        %1085 = vmatpush1.msra.mxu0 0.0
        %1086 = vmatprep.subr.mxu0 0.0
        %1087 = vmatpush1.msra.mxu0 0.0
        %1088 = vmatprep.subr.mxu0 0.0
        %1089 = vmatpush1.msra.mxu0 0.0
        %1090 = vmatprep.subr.mxu0 0.0
        %1091 = vmatpush1.msra.mxu0 0.0
        %1092 = vmatprep.subr.mxu0 0.0
        %1093 = vmatpush1.msra.mxu0 0.0
        %1094 = vmatprep.subr.mxu0 0.0
        %1095 = vmatpush1.msra.mxu0 0.0
        %1096 = vmatprep.subr.mxu0 0.0
        %1097 = vmatpush1.msra.mxu0 0.0
        %1098 = vmatprep.subr.mxu0 0.0
        %1099 = vmatpush1.msra.mxu0 0.0
        %1100 = vmatprep.subr.mxu0 0.0
        %1101 = vmatpush1.msra.mxu0 0.0
        %1102 = vmatprep.subr.mxu0 0.0
        %1103 = vmatpush1.msra.mxu0 0.0
        %1104 = vmatprep.subr.mxu0 0.0
        %1105 = vmatpush1.msra.mxu0 0.0
        %1106 = vmatprep.subr.mxu0 0.0
        %1107 = vmatpush1.msra.mxu0 0.0
        %1108 = vmatprep.subr.mxu0 0.0
        %1109 = vmatpush1.msra.mxu0 0.0
        %1110 = vmatprep.subr.mxu0 0.0
        %1111 = vmatpush1.msra.mxu0 0.0
        %1112 = vmatprep.subr.mxu0 0.0
        %1113 = vmatpush1.msra.mxu0 %v694
        %1114 = vmatprep.subr.mxu0 0.0
        %1115 = vmatpush1.msra.mxu0 %v689
        %1116 = vmatprep.subr.mxu0 0.0
        %1117 = vmatpush2.msra.mxu0 0.0
        %1118 = vmatprep.subr.mxu0 0.0
        %1119 = vmatpush2.msra.mxu0 0.0
        %1120 = vmatprep.subr.mxu0 0.0
        %1121 = vmatpush2.msra.mxu0 0.0
        %1122 = vmatprep.subr.mxu0 0.0
        %1123 = vmatpush2.msra.mxu0 0.0
        %1124 = vmatprep.subr.mxu0 0.0
        %1125 = vmatpush2.msra.mxu0 0.0
        %1126 = vmatprep.subr.mxu0 0.0
        %1127 = vmatpush2.msra.mxu0 0.0
        %1128 = vmatprep.subr.mxu0 0.0
        %1129 = vmatpush2.msra.mxu0 0.0
        %1130 = vmatprep.subr.mxu0 0.0
        %1131 = vmatpush2.msra.mxu0 0.0
        %1132 = vmatprep.subr.mxu0 0.0
        %1133 = vmatpush2.msra.mxu0 0.0
        %1134 = vmatprep.subr.mxu0 0.0
        %1135 = vmatpush2.msra.mxu0 0.0
        %1136 = vmatprep.subr.mxu0 0.0
        %1137 = vmatpush2.msra.mxu0 0.0
        %1138 = vmatprep.subr.mxu0 0.0
        %1139 = vmatpush2.msra.mxu0 0.0
        %1140 = vmatprep.subr.mxu0 0.0
        %1141 = vmatpush2.msra.mxu0 0.0
        %1142 = vmatprep.subr.mxu0 0.0
        %1143 = vmatpush2.msra.mxu0 0.0
        %1144 = vmatprep.subr.mxu0 0.0
        %1145 = vmatpush2.msra.mxu0 0.0
        %1146 = vmatprep.subr.mxu0 0.0
        %1147 = vmatpush2.msra.mxu0 0.0
        %1148 = vmatprep.mubr.f32.mxu0 0.0
        %1149 = vmatmul.mubr.f32.gmra.mxu0 %v1076
        %v1150 = vpop.f32.mrf.mxu0
        %v1151 = vadd.f32 %v1062, %v1150
        %v1152 = vpop.f32.mrf.mxu0
        %1153 = vmatprep.mubr.f32.mxu0 0.0
        %1154 = vmatmul.mubr.f32.gmra.mxu0 %v1079
        %v1155 = vpop.f32.mrf.mxu0
        %v1156 = vadd.f32 %v1067, %v1155
        %v1157 = vpop.f32.mrf.mxu0
        %1158 = vmatprep.mubr.f32.mxu0 0.0
        %1159 = vmatmul.mubr.f32.gmra.mxu0 %v1082
        %v1160 = vpop.f32.mrf.mxu0
        %v1161 = vadd.f32 %v1072, %v1160
        %v1162 = vpop.f32.mrf.mxu0
        %1163 = vdwg.mxu0
        %v1164 = vadd.f32 %v1151, %v927
        %v1165 = vadd.f32 %v1156, %v927
        %v1166 = vadd.f32 %v1161, %v927
        %v1167 = vxor.u32 %v1164, 2147483648
        %v1168 = vxor.u32 %v1165, 2147483648
        %v1169 = vxor.u32 %v1166, 2147483648
        %v1170 = vmul.f32 %v1167, 1.442695
        %v1171 = vpow.pop %v1170
        %v1172 = vmul.f32 %v1168, 1.442695
        %v1173 = vpow.pop %v1172
        %v1174 = vmul.f32 %v1169, 1.442695
        %v1175 = vpow.pop %v1174
        %v1176 = vadd.f32 %v1171, 1.0
        %v1177 = vadd.f32 %v1173, 1.0
        %v1178 = vadd.f32 %v1175, 1.0
        %v1179 = vrcp.pop %v1176
        %v1180 = vmul.f32 1.0, %v1179
        %v1181 = vrcp.pop %v1177
        %v1182 = vmul.f32 1.0, %v1181
        %v1183 = vrcp.pop %v1178
        %v1184 = vmul.f32 1.0, %v1183
        %v1185 = vmul.f32 %v945, %v1180
        %v1186 = vmul.f32 %v947, %v1182
        %v1187 = vmul.f32 %v949, %v1184
        %s1188 = smul.u32 %s32, 128
        %s1189 = sld [smem:[#allocation8 + %s1188]]
        %s1190 = sadd.f32 %s1189, 1.0
        %v1191 = vstv %s1190
        %v1192 = vmul.f32 %v1185, %v1191
        %v1193 = vmul.f32 %v1186, %v1191
        %v1194 = vmul.f32 %v1187, %v1191
        %v1195 = vld [vmem:[%s496] sm:$0x1]
        %v1196 = vlaneseq
        %v1197 = vshrl.u32 %v1196, 7
        %v1198 = vadd.s32 %v1197, 8
        %v1199 = vlaneseq
        %v1200 = vshrl.u32 %v1199, 7
        %v1201 = vsub.s32 0, %v1200
        %v1202 = vrot.slane %v1195, %v1201
        %vm1203 = vcmp.eq.s32.totalorder %v1197, %v1202
        %vm1204 = vcmp.eq.s32.totalorder %v1198, %v1202
        %v1205 = vsel %vm1203, 1, 0
        %v1206 = vsel %vm1204, 1, 0
        %v1207 = vcvt.s32.f32 %v1205
        %v1208 = vcvt.s32.f32 %v1206
        %v1209 = vld [vmem:[#allocation9] sm:$0xff]
        %v1210 = vld [vmem:[#allocation9 + $0x8] sm:$0xff]
        %vm1211 = vcmask 195584
        %v1213 = vsel %vm1211, %v1207, 0
        %v1216 = vsel %vm1211, %v1208, 0
        %1218 = vmatprep.subr.mxu0 0.0
        %1219 = vmatpush1.msra.mxu0 0.0
        %1220 = vmatprep.subr.mxu0 0.0
        %1221 = vmatpush1.msra.mxu0 0.0
        %1222 = vmatprep.subr.mxu0 0.0
        %1223 = vmatpush1.msra.mxu0 0.0
        %1224 = vmatprep.subr.mxu0 0.0
        %1225 = vmatpush1.msra.mxu0 0.0
        %1226 = vmatprep.subr.mxu0 0.0
        %1227 = vmatpush1.msra.mxu0 0.0
        %1228 = vmatprep.subr.mxu0 0.0
        %1229 = vmatpush1.msra.mxu0 0.0
        %1230 = vmatprep.subr.mxu0 0.0
        %1231 = vmatpush1.msra.mxu0 0.0
        %1232 = vmatprep.subr.mxu0 0.0
        %1233 = vmatpush1.msra.mxu0 0.0
        %1234 = vmatprep.subr.mxu0 0.0
        %1235 = vmatpush1.msra.mxu0 0.0
        %1236 = vmatprep.subr.mxu0 0.0
        %1237 = vmatpush1.msra.mxu0 0.0
        %1238 = vmatprep.subr.mxu0 0.0
        %1239 = vmatpush1.msra.mxu0 0.0
        %1240 = vmatprep.subr.mxu0 0.0
        %1241 = vmatpush1.msra.mxu0 0.0
        %1242 = vmatprep.subr.mxu0 0.0
        %1243 = vmatpush1.msra.mxu0 0.0
        %1244 = vmatprep.subr.mxu0 0.0
        %1245 = vmatpush1.msra.mxu0 %v1194
        %1246 = vmatprep.subr.mxu0 0.0
        %1247 = vmatpush1.msra.mxu0 %v1193
        %1248 = vmatprep.subr.mxu0 0.0
        %1249 = vmatpush1.msra.mxu0 %v1192
        %1250 = vmatprep.subr.mxu0 0.0
        %1251 = vmatpush2.msra.mxu0 0.0
        %1252 = vmatprep.subr.mxu0 0.0
        %1253 = vmatpush2.msra.mxu0 0.0
        %1254 = vmatprep.subr.mxu0 0.0
        %1255 = vmatpush2.msra.mxu0 0.0
        %1256 = vmatprep.subr.mxu0 0.0
        %1257 = vmatpush2.msra.mxu0 0.0
        %1258 = vmatprep.subr.mxu0 0.0
        %1259 = vmatpush2.msra.mxu0 0.0
        %1260 = vmatprep.subr.mxu0 0.0
        %1261 = vmatpush2.msra.mxu0 0.0
        %1262 = vmatprep.subr.mxu0 0.0
        %1263 = vmatpush2.msra.mxu0 0.0
        %1264 = vmatprep.subr.mxu0 0.0
        %1265 = vmatpush2.msra.mxu0 0.0
        %1266 = vmatprep.subr.mxu0 0.0
        %1267 = vmatpush2.msra.mxu0 0.0
        %1268 = vmatprep.subr.mxu0 0.0
        %1269 = vmatpush2.msra.mxu0 0.0
        %1270 = vmatprep.subr.mxu0 0.0
        %1271 = vmatpush2.msra.mxu0 0.0
        %1272 = vmatprep.subr.mxu0 0.0
        %1273 = vmatpush2.msra.mxu0 0.0
        %1274 = vmatprep.subr.mxu0 0.0
        %1275 = vmatpush2.msra.mxu0 0.0
        %1276 = vmatprep.subr.mxu0 0.0
        %1277 = vmatpush2.msra.mxu0 0.0
        %1278 = vmatprep.subr.mxu0 0.0
        %1279 = vmatpush2.msra.mxu0 0.0
        %1280 = vmatprep.subr.mxu0 0.0
        %1281 = vmatpush2.msra.mxu0 0.0
        %1282 = vmatprep.mubr.f32.mxu0 0.0
        %1283 = vmatmul.mubr.f32.gmra.mxu0 %v1213
        %v1284 = vpop.f32.mrf.mxu0
        %v1285 = vadd.f32 0.0, %v1284
        %v1286 = vpop.f32.mrf.mxu0
        %1287 = vmatprep.mubr.f32.mxu0 0.0
        %1288 = vmatmul.mubr.f32.gmra.mxu0 %v1216
        %v1289 = vpop.f32.mrf.mxu0
        %v1290 = vadd.f32 0.0, %v1289
        %v1291 = vpop.f32.mrf.mxu0
        %1292 = vdwg.mxu0
        %v1293 = vadd.f32 %v1209, %v1285
        %v1294 = vadd.f32 %v1210, %v1290
        %1295 = vst [vmem:[#allocation9] sm:$0xff] %v1293
        %1296 = vst [vmem:[#allocation9 + $0x8] sm:$0xff] %v1294
        // Predicated region
        $region77: #{tpu_custom_call.1} parent=59 // pred_check
          %p1297 = pneg %p297
        $region78: #{tpu_custom_call.1} parent=59 // pred_check_branch
          %1299 = sbr.rel (%p1297) target = $region80
        $region79: #{tpu_custom_call.1} parent=59 // pred_region
          %s1300 = smul.u32 2, %s31
          %s1302 = ssub.s32 256, 256
          %1303 = vsyncadd [#allocation4], %s1302
          %s1304 = smul.addr %s1300, 128
          %s1305 = scalar_lea.hbm %s10, %s1304
          %s1306 = sshll.u32 [#allocation9], 4
          %s1307 = int_to_ptr.vmem [resolvable:$true] %s1306
          %1312 = dma.vmem_to_hbm [thread:$0]  %s1307, 256, %s1305, [#allocation4], 128, 128, 8
        $region80: #{tpu_custom_call.1} parent=59 // pred_fallthru
          _
        // Predicated region
        $region81: #{tpu_custom_call.1} parent=59 // pred_check
          %p1313 = pneg %p297
        $region82: #{tpu_custom_call.1} parent=59 // pred_check_branch
          %1315 = sbr.rel (%p1313) target = $region84
        $region83: #{tpu_custom_call.1} parent=59 // pred_region
          %1316 = dma.done [#allocation4], 256
        $region84: #{tpu_custom_call.1} parent=59 // pred_fallthru
          _
      $region60: #{tpu_custom_call.1} parent=5 // pred_fallthru
        _
      %p1317 = scmp.le.s32.totalorder 2, %s22
      // Predicated region
      $region85: #{tpu_custom_call.1} parent=5 // pred_check
        %p1318 = pneg %p1317
      $region86: #{tpu_custom_call.1} parent=5 // pred_check_branch
        %1320 = sbr.rel (%p1318) target = $region88
      $region87: #{tpu_custom_call.1} parent=5 // pred_region
        %s1321 = ssub.s32 %s22, 2
      $region88: #{tpu_custom_call.1} parent=5 // pred_fallthru
        _
    $region6: #{tpu_custom_call.1} parent=1 // loop_footer
      %s26 = sadd.s32 1, %s22
    $region7: #{tpu_custom_call.1} parent=1 // loop_footer_branch
      %21 = sbr.rel target = $region3
    $region8: #{tpu_custom_call.1} parent=1 // loop_exit
      _
    %1322 = vsyncpa [#allocation3], 1
    %s1323 = scalar_lea.sflag [#allocation3], 1
    %1324 = vsyncpa %s1323, 1
    %1325 = vsyncpa [#allocation7], 1
    %s1326 = scalar_lea.sflag [#allocation7], 1
    %1327 = vsyncpa %s1326, 1
    %1328 = vsyncpa [#allocation4], 1
    %s1329 = scalar_lea.sflag [#allocation4], 1
    %1330 = vsyncpa %s1329, 1
    %1331 = vsyncpa [#allocation5], 1
    %s1332 = scalar_lea.sflag [#allocation5], 1
    %1333 = vsyncpa %s1332, 1

</llo_original>
